<compile_context>
chip_gen: v7x
topology: tpu7x:2x2x1
jax: 0.10.0
libtpu: 0.0.40
codegen_flags: <defaults>
</compile_context>

<pallas_src>
import functools

import jax
import jax.numpy as jnp
from jax import lax
from jax.experimental import pallas as pl
from jax.experimental.pallas import tpu as pltpu


def _bottleneck_kernel(x_ref, w1_ref, b1_ref, w2_ref, b2_ref, w3_ref, b3_ref,
                       o_ref, *, dilation):
    # x_ref: (1, H, W, Cin) float32 with Cin == 4 * planes
    _, H, W, Cin = x_ref.shape
    P = w1_ref.shape[1]          # planes
    d = dilation

    xm = x_ref[0].reshape(H * W, Cin)            # f32, reused for the residual
    xb = xm.astype(jnp.bfloat16)

    # ---- conv1 (1x1) + folded BN1 + ReLU ----------------------------------
    y1 = jnp.dot(xb, w1_ref[...], preferred_element_type=jnp.float32)
    y1 = jnp.maximum(y1 + b1_ref[...], 0.0)                       # (H*W, P) f32

    # ---- conv2 (3x3, padding=d, dilation=d, stride=1): im2col + ONE dot ---
    y1 = y1.reshape(H, W, P)
    zc = jnp.zeros((H, d, P), jnp.float32)
    yp = jnp.concatenate([zc, y1, zc], axis=1)                    # (H, W+2d, P)
    zr = jnp.zeros((d, W + 2 * d, P), jnp.float32)
    yp = jnp.concatenate([zr, yp, zr], axis=0)                    # (H+2d, W+2d, P)
    taps = [yp[kh * d:kh * d + H, kw * d:kw * d + W, :]
            for kh in range(3) for kw in range(3)]
    col = jnp.concatenate(taps, axis=-1)                          # (H, W, 9P)
    col = col.reshape(H * W, 9 * P).astype(jnp.bfloat16)
    y2 = jnp.dot(col, w2_ref[...], preferred_element_type=jnp.float32)
    y2 = jnp.maximum(y2 + b2_ref[...], 0.0)                       # (H*W, P) f32

    # ---- conv3 (1x1) + folded BN3, residual add, ReLU ----------------------
    y3 = jnp.dot(y2.astype(jnp.bfloat16), w3_ref[...],
                 preferred_element_type=jnp.float32)              # (H*W, 4P)
    out = jnp.maximum(y3 + b3_ref[...] + xm, 0.0)
    o_ref[0] = out.reshape(H, W, 4 * P).astype(o_ref.dtype)


def bottleneck_forward(x_nhwc, params, *, dilation=1):
    """x_nhwc: (N, H, W, Cin) float32, Cin == 4 * planes."""
    N, H, W, Cin = x_nhwc.shape
    w1, b1, w2, b2, w3, b3 = params
    P = w1.shape[1]
    assert Cin == 4 * P, "identity bottleneck requires inplanes == 4 * planes"

    kernel = functools.partial(_bottleneck_kernel, dilation=dilation)

    def full_spec(a):
        ndim = a.ndim
        def idx(n):
            return (0,) * ndim
        # NOTE: constant index map -> weights fetched once per pipeline;
        # pipeline_mode=pl.Buffered(1) could shave the second buffer on v7x.
        return pl.BlockSpec(a.shape, idx)

    return pl.pallas_call(
        kernel,
        out_shape=jax.ShapeDtypeStruct((N, H, W, 4 * P), jnp.float32),
        grid_spec=pltpu.PrefetchScalarGridSpec(
            num_scalar_prefetch=0,
            grid=(N,),
            in_specs=[
                pl.BlockSpec((1, H, W, Cin), lambda n: (n, 0, 0, 0)),
                full_spec(w1), full_spec(b1),
                full_spec(w2), full_spec(b2),
                full_spec(w3), full_spec(b3),
            ],
            out_specs=pl.BlockSpec((1, H, W, 4 * P), lambda n: (n, 0, 0, 0)),
        ),
        compiler_params=pltpu.CompilerParams(
            dimension_semantics=("parallel",)),
    )(x_nhwc, w1, b1, w2, b2, w3, b3)


# ---------------------------------------------------------------------------
# Parameter construction (deterministic, synthetic), BN folding, references.
# ---------------------------------------------------------------------------
def make_raw_params(key, inplanes, planes):
    """Raw f32 conv weights + BatchNorm (inference) statistics."""
    ks = jax.random.split(key, 6)

    def bn(k, c):
        kg, kb, km, kv = jax.random.split(k, 4)
        gamma = jax.random.uniform(kg, (c,), jnp.float32, 0.5, 1.5)
        beta = 0.1 * jax.random.normal(kb, (c,), jnp.float32)
        mean = 0.1 * jax.random.normal(km, (c,), jnp.float32)
        var = jax.random.uniform(kv, (c,), jnp.float32, 0.5, 1.5)
        return gamma, beta, mean, var

    w1 = 0.1 * jax.random.normal(ks[0], (inplanes, planes), jnp.float32)
    w2 = 0.1 * jax.random.normal(ks[1], (3, 3, planes, planes), jnp.float32)
    w3 = 0.1 * jax.random.normal(ks[2], (planes, 4 * planes), jnp.float32)
    return dict(w1=w1, bn1=bn(ks[3], planes),
                w2=w2, bn2=bn(ks[4], planes),
                w3=w3, bn3=bn(ks[5], 4 * planes))


def prepare_params(raw, eps=1e-5):
    """Fold BN scale into the conv weights (one-time), cast weights to bf16."""
    def fold(gamma, beta, mean, var):
        scale = gamma * lax.rsqrt(var + eps)
        bias = beta - mean * scale
        return scale, bias

    s1, b1 = fold(*raw["bn1"])
    s2, b2 = fold(*raw["bn2"])
    s3, b3 = fold(*raw["bn3"])
    P = raw["w1"].shape[1]
    w1 = (raw["w1"] * s1).astype(jnp.bfloat16)                       # (Cin, P)
    w2 = (raw["w2"] * s2).reshape(9 * P, P).astype(jnp.bfloat16)     # (9P, P)
    w3 = (raw["w3"] * s3).astype(jnp.bfloat16)                       # (P, 4P)
    return (w1, b1.reshape(1, -1), w2, b2.reshape(1, -1), w3, b3.reshape(1, -1))


def reference_forward_matched(x_nhwc, prepped, dilation=1):
    """Same numerics as the kernel: folded BN, bf16 inputs, f32 accumulation."""
    w1, b1, w2, b2, w3, b3 = prepped
    P = w1.shape[1]

    def conv(x, w, pad, dil):
        return lax.conv_general_dilated(
            x, w, window_strides=(1, 1),
            padding=[(pad, pad), (pad, pad)],
            rhs_dilation=(dil, dil),
            dimension_numbers=("NHWC", "HWIO", "NHWC"),
            preferred_element_type=jnp.float32)

    y = conv(x_nhwc.astype(jnp.bfloat16), w1.reshape(1, 1, *w1.shape), 0, 1)
    y = jnp.maximum(y + b1.reshape(-1), 0.0)
    y = conv(y.astype(jnp.bfloat16), w2.reshape(3, 3, P, P), dilation, dilation)
    y = jnp.maximum(y + b2.reshape(-1), 0.0)
    y = conv(y.astype(jnp.bfloat16), w3.reshape(1, 1, *w3.shape), 0, 1)
    y = y + b3.reshape(-1)
    return jnp.maximum(y + x_nhwc, 0.0)


def reference_forward_f32(x_nhwc, raw, dilation=1, eps=1e-5):
    """Original module semantics: f32 convs + BatchNorm(eval) + ReLU."""
    def conv(x, w, pad, dil):
        return lax.conv_general_dilated(
            x, w, window_strides=(1, 1),
            padding=[(pad, pad), (pad, pad)],
            rhs_dilation=(dil, dil),
            dimension_numbers=("NHWC", "HWIO", "NHWC"))

    def bn(y, p):
        gamma, beta, mean, var = p
        return (y - mean) * lax.rsqrt(var + eps) * gamma + beta

    P = raw["w1"].shape[1]
    y = jnp.maximum(bn(conv(x_nhwc, raw["w1"].reshape(1, 1, -1, P), 0, 1),
                       raw["bn1"]), 0.0)
    y = jnp.maximum(bn(conv(y, raw["w2"], dilation, dilation), raw["bn2"]), 0.0)
    y = bn(conv(y, raw["w3"].reshape(1, 1, P, 4 * P), 0, 1), raw["bn3"])
    return jnp.maximum(y + x_nhwc, 0.0)


if __name__ == "__main__":
    planes = 32
    inplanes = 4 * planes          # 128 -> lane-dense residual / output
    N, H, W = 2, 16, 16
    dilation = 1

    key = jax.random.PRNGKey(0)
    kx, kp = jax.random.split(key)
    x_nchw = jax.random.normal(kx, (N, inplanes, H, W), jnp.float32)  # PyTorch layout
    x_nhwc = jnp.transpose(x_nchw, (0, 2, 3, 1))                       # kernel layout

    raw = make_raw_params(kp, inplanes, planes)
    params = prepare_params(raw)

    out = bottleneck_forward(x_nhwc, params, dilation=dilation)
    out = jax.block_until_ready(out)
    assert out.shape == (N, H, W, 4 * planes)

    # Bit-for-bit-style check against a reference with identical numerics
    # (folded BN, bf16 matmul inputs, f32 accumulation).
    ref = reference_forward_matched(x_nhwc, params, dilation=dilation)
    assert jnp.allclose(out, ref, atol=3e-3, rtol=3e-3), \
        f"matched-ref max abs diff {jnp.max(jnp.abs(out - ref))}"

    # Loose check against the original-module f32 semantics (bf16 rounding only).
    ref32 = reference_forward_f32(x_nhwc, raw, dilation=dilation)
    assert jnp.allclose(out, ref32, atol=8e-2, rtol=8e-2), \
        f"f32-ref max abs diff {jnp.max(jnp.abs(out - ref32))}"

    print("KERNEL_OK")
</pallas_src>

<mosaic_0001>
module attributes {stable_mosaic.version = 11 : i64} {
  func.func @_bottleneck_kernel(%arg0: i32, %arg1: memref<1x16x16x128xf32, #tpu.memory_space<vmem>>, %arg2: memref<128x32xbf16, #tpu.memory_space<vmem>>, %arg3: memref<1x32xf32, #tpu.memory_space<vmem>>, %arg4: memref<288x32xbf16, #tpu.memory_space<vmem>>, %arg5: memref<1x32xf32, #tpu.memory_space<vmem>>, %arg6: memref<32x128xbf16, #tpu.memory_space<vmem>>, %arg7: memref<1x128xf32, #tpu.memory_space<vmem>>, %arg8: memref<1x16x16x128xf32, #tpu.memory_space<vmem>>) attributes {dimension_semantics = [#tpu.dimension_semantics<parallel>], iteration_bounds = array<i64: 2>, scalar_prefetch = 0 : i64, scratch_operands = 0 : i64, tpu.core_type = #tpu.core_type<tc>, window_params = [{transform_indices = @transform_0, window_bounds = array<i64: 1, 16, 16, 128>}, {pipeline_mode = #tpu.pipeline_mode<synchronous>, transform_indices = @transform_1, window_bounds = array<i64: 128, 32>}, {pipeline_mode = #tpu.pipeline_mode<synchronous>, transform_indices = @transform_2, window_bounds = array<i64: 1, 32>}, {pipeline_mode = #tpu.pipeline_mode<synchronous>, transform_indices = @transform_3, window_bounds = array<i64: 288, 32>}, {pipeline_mode = #tpu.pipeline_mode<synchronous>, transform_indices = @transform_4, window_bounds = array<i64: 1, 32>}, {pipeline_mode = #tpu.pipeline_mode<synchronous>, transform_indices = @transform_5, window_bounds = array<i64: 32, 128>}, {pipeline_mode = #tpu.pipeline_mode<synchronous>, transform_indices = @transform_6, window_bounds = array<i64: 1, 128>}, {transform_indices = @transform_7, window_bounds = array<i64: 1, 16, 16, 128>}]} {
    %c0 = arith.constant 0 : index
    %c0_0 = arith.constant 0 : index
    %c0_1 = arith.constant 0 : index
    %c0_2 = arith.constant 0 : index
    %0 = vector.load %arg1[%c0, %c0_0, %c0_1, %c0_2] : memref<1x16x16x128xf32, #tpu.memory_space<vmem>>, vector<1x16x16x128xf32>
    %1 = vector.shape_cast %0 : vector<1x16x16x128xf32> to vector<16x16x128xf32>
    %2 = vector.shape_cast %1 : vector<16x16x128xf32> to vector<256x128xf32>
    %3 = arith.truncf %2 : vector<256x128xf32> to vector<256x128xbf16>
    %c0_3 = arith.constant 0 : index
    %c0_4 = arith.constant 0 : index
    %4 = vector.load %arg2[%c0_3, %c0_4] : memref<128x32xbf16, #tpu.memory_space<vmem>>, vector<128x32xbf16>
    %cst = arith.constant dense<0.000000e+00> : vector<256x32xf32>
    %5 = tpu.matmul %3, %4, %cst {dimension_numbers = #tpu.dot_dimension_numbers<[1], [0], [0], [1], [0, 0, 1, 1], [], []>} : vector<256x128xbf16>, vector<128x32xbf16>, vector<256x32xf32> -> vector<256x32xf32>
    %c0_5 = arith.constant 0 : index
    %c0_6 = arith.constant 0 : index
    %6 = vector.load %arg3[%c0_5, %c0_6] : memref<1x32xf32, #tpu.memory_space<vmem>>, vector<1x32xf32>
    %7 = vector.broadcast %6 : vector<1x32xf32> to vector<256x32xf32>
    %8 = arith.addf %5, %7 : vector<256x32xf32>
    %cst_7 = arith.constant 0.000000e+00 : f32
    %9 = vector.broadcast %cst_7 : f32 to vector<256x32xf32>
    %10 = arith.maximumf %8, %9 : vector<256x32xf32>
    %11 = vector.shape_cast %10 : vector<256x32xf32> to vector<16x16x32xf32>
    %cst_8 = arith.constant 0.000000e+00 : f32
    %12 = vector.broadcast %cst_8 : f32 to vector<16x1x32xf32>
    %13 = tpu.concatenate %12, %11, %12 in 1 : vector<16x1x32xf32>, vector<16x16x32xf32>, vector<16x1x32xf32> -> vector<16x18x32xf32>
    %cst_9 = arith.constant 0.000000e+00 : f32
    %14 = vector.broadcast %cst_9 : f32 to vector<1x18x32xf32>
    %15 = tpu.concatenate %14, %13, %14 in 0 : vector<1x18x32xf32>, vector<16x18x32xf32>, vector<1x18x32xf32> -> vector<18x18x32xf32>
    %16 = vector.extract_strided_slice %15 {offsets = [0, 0, 0], sizes = [16, 16, 32], strides = [1, 1, 1]} : vector<18x18x32xf32> to vector<16x16x32xf32>
    %17 = vector.extract_strided_slice %15 {offsets = [0, 1, 0], sizes = [16, 16, 32], strides = [1, 1, 1]} : vector<18x18x32xf32> to vector<16x16x32xf32>
    %18 = vector.extract_strided_slice %15 {offsets = [0, 2, 0], sizes = [16, 16, 32], strides = [1, 1, 1]} : vector<18x18x32xf32> to vector<16x16x32xf32>
    %19 = vector.extract_strided_slice %15 {offsets = [1, 0, 0], sizes = [16, 16, 32], strides = [1, 1, 1]} : vector<18x18x32xf32> to vector<16x16x32xf32>
    %20 = vector.extract_strided_slice %15 {offsets = [1, 1, 0], sizes = [16, 16, 32], strides = [1, 1, 1]} : vector<18x18x32xf32> to vector<16x16x32xf32>
    %21 = vector.extract_strided_slice %15 {offsets = [1, 2, 0], sizes = [16, 16, 32], strides = [1, 1, 1]} : vector<18x18x32xf32> to vector<16x16x32xf32>
    %22 = vector.extract_strided_slice %15 {offsets = [2, 0, 0], sizes = [16, 16, 32], strides = [1, 1, 1]} : vector<18x18x32xf32> to vector<16x16x32xf32>
    %23 = vector.extract_strided_slice %15 {offsets = [2, 1, 0], sizes = [16, 16, 32], strides = [1, 1, 1]} : vector<18x18x32xf32> to vector<16x16x32xf32>
    %24 = vector.extract_strided_slice %15 {offsets = [2, 2, 0], sizes = [16, 16, 32], strides = [1, 1, 1]} : vector<18x18x32xf32> to vector<16x16x32xf32>
    %25 = tpu.concatenate %16, %17, %18, %19, %20, %21, %22, %23, %24 in 2 : vector<16x16x32xf32>, vector<16x16x32xf32>, vector<16x16x32xf32>, vector<16x16x32xf32>, vector<16x16x32xf32>, vector<16x16x32xf32>, vector<16x16x32xf32>, vector<16x16x32xf32>, vector<16x16x32xf32> -> vector<16x16x288xf32>
    %26 = vector.shape_cast %25 : vector<16x16x288xf32> to vector<256x288xf32>
    %27 = arith.truncf %26 : vector<256x288xf32> to vector<256x288xbf16>
    %c0_10 = arith.constant 0 : index
    %c0_11 = arith.constant 0 : index
    %28 = vector.load %arg4[%c0_10, %c0_11] : memref<288x32xbf16, #tpu.memory_space<vmem>>, vector<288x32xbf16>
    %cst_12 = arith.constant dense<0.000000e+00> : vector<256x32xf32>
    %29 = tpu.matmul %27, %28, %cst_12 {dimension_numbers = #tpu.dot_dimension_numbers<[1], [0], [0], [1], [0, 0, 1, 1], [], []>} : vector<256x288xbf16>, vector<288x32xbf16>, vector<256x32xf32> -> vector<256x32xf32>
    %c0_13 = arith.constant 0 : index
    %c0_14 = arith.constant 0 : index
    %30 = vector.load %arg5[%c0_13, %c0_14] : memref<1x32xf32, #tpu.memory_space<vmem>>, vector<1x32xf32>
    %31 = vector.broadcast %30 : vector<1x32xf32> to vector<256x32xf32>
    %32 = arith.addf %29, %31 : vector<256x32xf32>
    %cst_15 = arith.constant 0.000000e+00 : f32
    %33 = vector.broadcast %cst_15 : f32 to vector<256x32xf32>
    %34 = arith.maximumf %32, %33 : vector<256x32xf32>
    %35 = arith.truncf %34 : vector<256x32xf32> to vector<256x32xbf16>
    %c0_16 = arith.constant 0 : index
    %c0_17 = arith.constant 0 : index
    %36 = vector.load %arg6[%c0_16, %c0_17] : memref<32x128xbf16, #tpu.memory_space<vmem>>, vector<32x128xbf16>
    %cst_18 = arith.constant dense<0.000000e+00> : vector<256x128xf32>
    %37 = tpu.matmul %35, %36, %cst_18 {dimension_numbers = #tpu.dot_dimension_numbers<[1], [0], [0], [1], [0, 0, 1, 1], [], []>} : vector<256x32xbf16>, vector<32x128xbf16>, vector<256x128xf32> -> vector<256x128xf32>
    %c0_19 = arith.constant 0 : index
    %c0_20 = arith.constant 0 : index
    %38 = vector.load %arg7[%c0_19, %c0_20] : memref<1x128xf32, #tpu.memory_space<vmem>>, vector<1x128xf32>
    %39 = vector.broadcast %38 : vector<1x128xf32> to vector<256x128xf32>
    %40 = arith.addf %37, %39 : vector<256x128xf32>
    %41 = arith.addf %40, %2 : vector<256x128xf32>
    %cst_21 = arith.constant 0.000000e+00 : f32
    %42 = vector.broadcast %cst_21 : f32 to vector<256x128xf32>
    %43 = arith.maximumf %41, %42 : vector<256x128xf32>
    %44 = vector.shape_cast %43 : vector<256x128xf32> to vector<16x16x128xf32>
    %c0_22 = arith.constant 0 : index
    %c0_23 = arith.constant 0 : index
    %c0_24 = arith.constant 0 : index
    %c0_25 = arith.constant 0 : index
    %45 = vector.load %arg8[%c0_22, %c0_23, %c0_24, %c0_25] : memref<1x16x16x128xf32, #tpu.memory_space<vmem>>, vector<1x16x16x128xf32>
    %46 = vector.shape_cast %45 : vector<1x16x16x128xf32> to vector<16x16x128xf32>
    %47 = vector.shape_cast %44 : vector<16x16x128xf32> to vector<1x16x16x128xf32>
    tpu.vector_store %arg8[%c0_22, %c0_23, %c0_24, %c0_25], %47 {strides = array<i32>} : memref<1x16x16x128xf32, #tpu.memory_space<vmem>>, vector<1x16x16x128xf32>,
    return
  }
  func.func @transform_0(%arg0: i32) -> (i32, i32, i32, i32) {
    %c0_i32 = arith.constant 0 : i32
    %c0_i32_0 = arith.constant 0 : i32
    %c0_i32_1 = arith.constant 0 : i32
    %c0_i32_2 = arith.constant 0 : i32
    return %arg0, %c0_i32, %c0_i32_0, %c0_i32_1 : i32, i32, i32, i32
  }
  func.func @transform_1(%arg0: i32) -> (i32, i32) {
    %c0_i32 = arith.constant 0 : i32
    %c0_i32_0 = arith.constant 0 : i32
    %c0_i32_1 = arith.constant 0 : i32
    return %c0_i32, %c0_i32_0 : i32, i32
  }
  func.func @transform_2(%arg0: i32) -> (i32, i32) {
    %c0_i32 = arith.constant 0 : i32
    %c0_i32_0 = arith.constant 0 : i32
    %c0_i32_1 = arith.constant 0 : i32
    return %c0_i32, %c0_i32_0 : i32, i32
  }
  func.func @transform_3(%arg0: i32) -> (i32, i32) {
    %c0_i32 = arith.constant 0 : i32
    %c0_i32_0 = arith.constant 0 : i32
    %c0_i32_1 = arith.constant 0 : i32
    return %c0_i32, %c0_i32_0 : i32, i32
  }
  func.func @transform_4(%arg0: i32) -> (i32, i32) {
    %c0_i32 = arith.constant 0 : i32
    %c0_i32_0 = arith.constant 0 : i32
    %c0_i32_1 = arith.constant 0 : i32
    return %c0_i32, %c0_i32_0 : i32, i32
  }
  func.func @transform_5(%arg0: i32) -> (i32, i32) {
    %c0_i32 = arith.constant 0 : i32
    %c0_i32_0 = arith.constant 0 : i32
    %c0_i32_1 = arith.constant 0 : i32
    return %c0_i32, %c0_i32_0 : i32, i32
  }
  func.func @transform_6(%arg0: i32) -> (i32, i32) {
    %c0_i32 = arith.constant 0 : i32
    %c0_i32_0 = arith.constant 0 : i32
    %c0_i32_1 = arith.constant 0 : i32
    return %c0_i32, %c0_i32_0 : i32, i32
  }
  func.func @transform_7(%arg0: i32) -> (i32, i32, i32, i32) {
    %c0_i32 = arith.constant 0 : i32
    %c0_i32_0 = arith.constant 0 : i32
    %c0_i32_1 = arith.constant 0 : i32
    %c0_i32_2 = arith.constant 0 : i32
    return %arg0, %c0_i32, %c0_i32_0, %c0_i32_1 : i32, i32, i32, i32
  }
}

</mosaic_0001>

<llo_original>
// kernel: tpu_custom_call.1
$region0: #{tpu_custom_call.1}
  #allocation0 [shape = 'u32[]', space=smem, size = 0x4, offset = 0x4, fixed_abs, tag = 'smem constant byte address 0x4 - core index']
  #allocation1 [shape = 'u32[144,128]{1,0:T(1,128)}', space=vmem, size = 0x12000, scoped, tag = 'internal scratch']
  %s0 = inlined_call_operand.hbm [shape: f32[2,16,16,128], index: 0, kind: input, shape index: {}]
  %s1 = inlined_call_operand.vmem [shape: bf16[128,32], index: 1, kind: input, shape index: {}]
  %s2 = inlined_call_operand.vmem [shape: f32[1,32], index: 2, kind: input, shape index: {}]
  %s3 = inlined_call_operand.vmem [shape: bf16[288,32], index: 3, kind: input, shape index: {}]
  %s4 = inlined_call_operand.vmem [shape: f32[1,32], index: 4, kind: input, shape index: {}]
  %s5 = inlined_call_operand.vmem [shape: bf16[32,128], index: 5, kind: input, shape index: {}]
  %s6 = inlined_call_operand.vmem [shape: f32[1,128], index: 6, kind: input, shape index: {}]
  %s7 = inlined_call_operand.hbm [shape: f32[2,16,16,128], index: 7, kind: output, shape index: {}]
  %s8 = sld [smem:[#allocation0]]
  $region65: #{tpu_custom_call.1} parent=0
    _
  %s10 = ssub.s32 1, %s8
  %s11 = scalar_select 0, %s10, %s8
  $region1: #{tpu_custom_call.1} parent=0
    #allocation2 [shape = 'u8[262144]{0}', space=vmem, size = 0x40000, scoped, tag = 'input window, operand 0']
    #allocation3 [shape = 's32[2]{0}', space=sflag, size = 0x8, scoped, tag = 'scoped memory for tpu_custom_call.1']
    #allocation4 [shape = 's32[2]{0}', space=sflag, size = 0x8, scoped, tag = 'scoped memory for tpu_custom_call.1']
    #allocation5 [shape = 'u8[262144]{0}', space=vmem, size = 0x40000, scoped, tag = 'output window, operand 0']
    %12 = vsyncpa [#allocation3], 0
    %s13 = scalar_lea.sflag [#allocation3], 1
    %14 = vsyncpa %s13, 0
    %15 = vsyncpa [#allocation4], 0
    %s16 = scalar_lea.sflag [#allocation4], 1
    %17 = vsyncpa %s16, 0
    loop: start=0, step=1, limit=4
    $region2: #{tpu_custom_call.1} parent=1 // loop_pre_header
      _
    $region3: #{tpu_custom_call.1} parent=1 // loop_header
      %s19 = sphi 0, %s23
      %p20 = scmp.ge.s32.totalorder %s19, 4
      %s29 = sphi 0, %s31
      %s32 = sphi 0, %s29
      %s33 = sphi 0, %s32
      %s49 = sphi 0, %s33
      %s53 = sphi 0, %s53
      %s55 = sphi 0, %s53
      %s56 = sphi 0, %s55
      %s70 = sphi 0, %s56
      %s74 = sphi 0, %s74
      %s76 = sphi 0, %s74
      %s77 = sphi 0, %s76
      %s91 = sphi 0, %s77
      %s95 = sphi 0, %s95
      %s97 = sphi 0, %s95
      %s98 = sphi 0, %s97
      %s112 = sphi 0, %s98
      %s116 = sphi 0, %s116
      %s118 = sphi 0, %s116
      %s119 = sphi 0, %s118
      %s133 = sphi 0, %s119
      %s137 = sphi 0, %s137
      %s139 = sphi 0, %s137
      %s140 = sphi 0, %s139
      %s154 = sphi 0, %s140
      %s158 = sphi 0, %s158
      %s160 = sphi 0, %s158
      %s161 = sphi 0, %s160
      %s175 = sphi 0, %s161
      %s181 = sphi 0, %s183
      %s184 = sphi 0, %s181
      %s185 = sphi 0, %s184
      %s201 = sphi 0, %s185
    $region4: #{tpu_custom_call.1} parent=1 // loop_header_branch
      %22 = sbr.rel (%p20) target = $region8
    $region5: #{tpu_custom_call.1} parent=1 // loop_body
      %s24 = ssub.s32 %s19, 1
      %s25 = ssub.s32 %s19, 2
      %s26 = sadd.s32 %s19, 1
      %s27 = ssub.s32 %s19, %s26
      %p28 = scmp.eq.s32.totalorder %s27, 0
      %s30 = sadd.s32 %s29, 1
      %s31 = scalar_select %p28, %s29, %s30
      %p34 = pneg %p28
      %p35 = scmp.eq.s32.totalorder %s19, 1
      %p36 = por %p34, %p35
      %p37 = scmp.ne.s32.totalorder %s29, %s32
      %p38 = scmp.eq.s32.totalorder %s19, 0
      %p39 = por %p37, %p38
      %p40 = scmp.ne.s32.totalorder %s29, %s32
      %p41 = scmp.eq.s32.totalorder %s24, 1
      %p42 = por %p40, %p41
      %p43 = scmp.ne.s32.totalorder %s32, %s33
      %p44 = scmp.eq.s32.totalorder %s24, 0
      %p45 = por %p43, %p44
      %p46 = scmp.ne.s32.totalorder %s32, %s33
      %p47 = scmp.eq.s32.totalorder %s25, 1
      %p48 = por %p46, %p47
      %p50 = scmp.ne.s32.totalorder %s33, %s49
      %p51 = scmp.eq.s32.totalorder %s25, 0
      %p52 = por %p50, %p51
      %s54 = sadd.s32 %s53, 1
      %p57 = scmp.eq.s32.totalorder %s19, 1
      %p58 = scmp.ne.s32.totalorder %s53, %s55
      %p59 = scmp.eq.s32.totalorder %s19, 0
      %p60 = por %p58, %p59
      %p61 = scmp.ne.s32.totalorder %s53, %s55
      %p62 = scmp.eq.s32.totalorder %s24, 1
      %p63 = por %p61, %p62
      %p64 = scmp.ne.s32.totalorder %s55, %s56
      %p65 = scmp.eq.s32.totalorder %s24, 0
      %p66 = por %p64, %p65
      %p67 = scmp.ne.s32.totalorder %s55, %s56
      %p68 = scmp.eq.s32.totalorder %s25, 1
      %p69 = por %p67, %p68
      %p71 = scmp.ne.s32.totalorder %s56, %s70
      %p72 = scmp.eq.s32.totalorder %s25, 0
      %p73 = por %p71, %p72
      %s75 = sadd.s32 %s74, 1
      %p78 = scmp.eq.s32.totalorder %s19, 1
      %p79 = scmp.ne.s32.totalorder %s74, %s76
      %p80 = scmp.eq.s32.totalorder %s19, 0
      %p81 = por %p79, %p80
      %p82 = scmp.ne.s32.totalorder %s74, %s76
      %p83 = scmp.eq.s32.totalorder %s24, 1
      %p84 = por %p82, %p83
      %p85 = scmp.ne.s32.totalorder %s76, %s77
      %p86 = scmp.eq.s32.totalorder %s24, 0
      %p87 = por %p85, %p86
      %p88 = scmp.ne.s32.totalorder %s76, %s77
      %p89 = scmp.eq.s32.totalorder %s25, 1
      %p90 = por %p88, %p89
      %p92 = scmp.ne.s32.totalorder %s77, %s91
      %p93 = scmp.eq.s32.totalorder %s25, 0
      %p94 = por %p92, %p93
      %s96 = sadd.s32 %s95, 1
      %p99 = scmp.eq.s32.totalorder %s19, 1
      %p100 = scmp.ne.s32.totalorder %s95, %s97
      %p101 = scmp.eq.s32.totalorder %s19, 0
      %p102 = por %p100, %p101
      %p103 = scmp.ne.s32.totalorder %s95, %s97
      %p104 = scmp.eq.s32.totalorder %s24, 1
      %p105 = por %p103, %p104
      %p106 = scmp.ne.s32.totalorder %s97, %s98
      %p107 = scmp.eq.s32.totalorder %s24, 0
      %p108 = por %p106, %p107
      %p109 = scmp.ne.s32.totalorder %s97, %s98
      %p110 = scmp.eq.s32.totalorder %s25, 1
      %p111 = por %p109, %p110
      %p113 = scmp.ne.s32.totalorder %s98, %s112
      %p114 = scmp.eq.s32.totalorder %s25, 0
      %p115 = por %p113, %p114
      %s117 = sadd.s32 %s116, 1
      %p120 = scmp.eq.s32.totalorder %s19, 1
      %p121 = scmp.ne.s32.totalorder %s116, %s118
      %p122 = scmp.eq.s32.totalorder %s19, 0
      %p123 = por %p121, %p122
      %p124 = scmp.ne.s32.totalorder %s116, %s118
      %p125 = scmp.eq.s32.totalorder %s24, 1
      %p126 = por %p124, %p125
      %p127 = scmp.ne.s32.totalorder %s118, %s119
      %p128 = scmp.eq.s32.totalorder %s24, 0
      %p129 = por %p127, %p128
      %p130 = scmp.ne.s32.totalorder %s118, %s119
      %p131 = scmp.eq.s32.totalorder %s25, 1
      %p132 = por %p130, %p131
      %p134 = scmp.ne.s32.totalorder %s119, %s133
      %p135 = scmp.eq.s32.totalorder %s25, 0
      %p136 = por %p134, %p135
      %s138 = sadd.s32 %s137, 1
      %p141 = scmp.eq.s32.totalorder %s19, 1
      %p142 = scmp.ne.s32.totalorder %s137, %s139
      %p143 = scmp.eq.s32.totalorder %s19, 0
      %p144 = por %p142, %p143
      %p145 = scmp.ne.s32.totalorder %s137, %s139
      %p146 = scmp.eq.s32.totalorder %s24, 1
      %p147 = por %p145, %p146
      %p148 = scmp.ne.s32.totalorder %s139, %s140
      %p149 = scmp.eq.s32.totalorder %s24, 0
      %p150 = por %p148, %p149
      %p151 = scmp.ne.s32.totalorder %s139, %s140
      %p152 = scmp.eq.s32.totalorder %s25, 1
      %p153 = por %p151, %p152
      %p155 = scmp.ne.s32.totalorder %s140, %s154
      %p156 = scmp.eq.s32.totalorder %s25, 0
      %p157 = por %p155, %p156
      %s159 = sadd.s32 %s158, 1
      %p162 = scmp.eq.s32.totalorder %s19, 1
      %p163 = scmp.ne.s32.totalorder %s158, %s160
      %p164 = scmp.eq.s32.totalorder %s19, 0
      %p165 = por %p163, %p164
      %p166 = scmp.ne.s32.totalorder %s158, %s160
      %p167 = scmp.eq.s32.totalorder %s24, 1
      %p168 = por %p166, %p167
      %p169 = scmp.ne.s32.totalorder %s160, %s161
      %p170 = scmp.eq.s32.totalorder %s24, 0
      %p171 = por %p169, %p170
      %p172 = scmp.ne.s32.totalorder %s160, %s161
      %p173 = scmp.eq.s32.totalorder %s25, 1
      %p174 = por %p172, %p173
      %p176 = scmp.ne.s32.totalorder %s161, %s175
      %p177 = scmp.eq.s32.totalorder %s25, 0
      %p178 = por %p176, %p177
      %s179 = ssub.s32 %s19, %s26
      %p180 = scmp.eq.s32.totalorder %s179, 0
      %s182 = sadd.s32 %s181, 1
      %s183 = scalar_select %p180, %s181, %s182
      %p186 = pneg %p180
      %p187 = scmp.eq.s32.totalorder %s19, 1
      %p188 = por %p186, %p187
      %p189 = scmp.ne.s32.totalorder %s181, %s184
      %p190 = scmp.eq.s32.totalorder %s19, 0
      %p191 = por %p189, %p190
      %p192 = scmp.ne.s32.totalorder %s181, %s184
      %p193 = scmp.eq.s32.totalorder %s24, 1
      %p194 = por %p192, %p193
      %p195 = scmp.ne.s32.totalorder %s184, %s185
      %p196 = scmp.eq.s32.totalorder %s24, 0
      %p197 = por %p195, %p196
      %p198 = scmp.ne.s32.totalorder %s184, %s185
      %p199 = scmp.eq.s32.totalorder %s25, 1
      %p200 = por %p198, %p199
      %p202 = scmp.ne.s32.totalorder %s185, %s201
      %p203 = scmp.eq.s32.totalorder %s25, 0
      %p204 = por %p202, %p203
      %p205 = scmp.le.s32.totalorder 1, %s19
      %p206 = scmp.lt.s32.totalorder %s19, 3
      %p207 = pnand %p205, %p206
      %p208 = pneg %p207
      // Predicated region
      $region9: #{tpu_custom_call.1} parent=5 // pred_check
        _
      $region10: #{tpu_custom_call.1} parent=5 // pred_check_branch
        %210 = sbr.rel (%p207) target = $region12
      $region11: #{tpu_custom_call.1} parent=5 // pred_region
        %s211 = ssub.s32 %s19, 1
        // Predicated region
        $region13: #{tpu_custom_call.1} parent=11 // pred_check
          %p212 = pneg %p66
        $region14: #{tpu_custom_call.1} parent=11 // pred_check_branch
          %214 = sbr.rel (%p212) target = $region16
        $region15: #{tpu_custom_call.1} parent=11 // pred_region
          _
        $region16: #{tpu_custom_call.1} parent=11 // pred_fallthru
          _
        // Predicated region
        $region17: #{tpu_custom_call.1} parent=11 // pred_check
          %p215 = pneg %p87
        $region18: #{tpu_custom_call.1} parent=11 // pred_check_branch
          %217 = sbr.rel (%p215) target = $region20
        $region19: #{tpu_custom_call.1} parent=11 // pred_region
          _
        $region20: #{tpu_custom_call.1} parent=11 // pred_fallthru
          _
        // Predicated region
        $region21: #{tpu_custom_call.1} parent=11 // pred_check
          %p218 = pneg %p108
        $region22: #{tpu_custom_call.1} parent=11 // pred_check_branch
          %220 = sbr.rel (%p218) target = $region24
        $region23: #{tpu_custom_call.1} parent=11 // pred_region
          _
        $region24: #{tpu_custom_call.1} parent=11 // pred_fallthru
          _
        // Predicated region
        $region25: #{tpu_custom_call.1} parent=11 // pred_check
          %p221 = pneg %p129
        $region26: #{tpu_custom_call.1} parent=11 // pred_check_branch
          %223 = sbr.rel (%p221) target = $region28
        $region27: #{tpu_custom_call.1} parent=11 // pred_region
          _
        $region28: #{tpu_custom_call.1} parent=11 // pred_fallthru
          _
        // Predicated region
        $region29: #{tpu_custom_call.1} parent=11 // pred_check
          %p224 = pneg %p150
        $region30: #{tpu_custom_call.1} parent=11 // pred_check_branch
          %226 = sbr.rel (%p224) target = $region32
        $region31: #{tpu_custom_call.1} parent=11 // pred_region
          _
        $region32: #{tpu_custom_call.1} parent=11 // pred_fallthru
          _
        // Predicated region
        $region33: #{tpu_custom_call.1} parent=11 // pred_check
          %p227 = pneg %p171
        $region34: #{tpu_custom_call.1} parent=11 // pred_check_branch
          %229 = sbr.rel (%p227) target = $region36
        $region35: #{tpu_custom_call.1} parent=11 // pred_region
          _
        $region36: #{tpu_custom_call.1} parent=11 // pred_fallthru
          _
      $region12: #{tpu_custom_call.1} parent=5 // pred_fallthru
        _
      %p230 = scmp.lt.s32.totalorder %s19, 2
      // Predicated region
      $region37: #{tpu_custom_call.1} parent=5 // pred_check
        %p231 = pneg %p230
      $region38: #{tpu_custom_call.1} parent=5 // pred_check_branch
        %233 = sbr.rel (%p231) target = $region40
      $region39: #{tpu_custom_call.1} parent=5 // pred_region
        // Predicated region
        $region41: #{tpu_custom_call.1} parent=39 // pred_check
          %p234 = pneg %p39
        $region42: #{tpu_custom_call.1} parent=39 // pred_check_branch
          %236 = sbr.rel (%p234) target = $region44
        $region43: #{tpu_custom_call.1} parent=39 // pred_region
          %s237 = sand.u32 %s29, 1
          %s238 = scalar_lea.sflag [#allocation3], %s237
          %s239 = sand.u32 %s29, 1
          %s240 = smul.addr %s239, 256
          %s241 = scalar_lea.vmem [#allocation2], %s240
          %s243 = ssub.s32 4096, 4096
          %244 = vsyncadd %s238, %s243
          %s245 = smul.addr %s19, 32
          %s246 = smul.addr %s245, 128
          %s247 = scalar_lea.hbm %s0, %s246
          %s248 = sshll.u32 %s241, 4
          %s249 = int_to_ptr.vmem [resolvable:$true] %s248
          %254 = dma.hbm_to_vmem [thread:$0]  %s247, 4096, %s249, %s238, 128, 128, 8
        $region44: #{tpu_custom_call.1} parent=39 // pred_fallthru
          _
      $region40: #{tpu_custom_call.1} parent=5 // pred_fallthru
        _
      %p255 = scmp.le.s32.totalorder 1, %s19
      %p256 = scmp.lt.s32.totalorder %s19, 3
      %p257 = pnand %p255, %p256
      %p258 = pneg %p257
      // Predicated region
      $region45: #{tpu_custom_call.1} parent=5 // pred_check
        _
      $region46: #{tpu_custom_call.1} parent=5 // pred_check_branch
        %260 = sbr.rel (%p257) target = $region48
      $region47: #{tpu_custom_call.1} parent=5 // pred_region
        %s261 = ssub.s32 %s19, 1
        %s262 = sand.u32 %s32, 1
        %s263 = scalar_lea.sflag [#allocation3], %s262
        %s264 = sand.u32 %s32, 1
        %s265 = smul.addr %s264, 256
        %s266 = scalar_lea.vmem [#allocation2], %s265
        // Predicated region
        $region49: #{tpu_custom_call.1} parent=47 // pred_check
          %p267 = pneg %p45
        $region50: #{tpu_custom_call.1} parent=47 // pred_check_branch
          %269 = sbr.rel (%p267) target = $region52
        $region51: #{tpu_custom_call.1} parent=47 // pred_region
          %270 = dma.done %s263, 4096
        $region52: #{tpu_custom_call.1} parent=47 // pred_fallthru
          _
        %s271 = sand.u32 %s32, 1
        %s272 = scalar_lea.sflag [#allocation3], %s271
        %s273 = sand.u32 %s32, 1
        %s274 = smul.addr %s273, 256
        %s275 = scalar_lea.vmem [#allocation2], %s274
        %p276 = pneg %p45
        %p277 = pneg %p42
        %p278 = pneg %p66
        %p279 = pneg %p63
        %p280 = pneg %p87
        %p281 = pneg %p84
        %p282 = pneg %p108
        %p283 = pneg %p105
        %p284 = pneg %p129
        %p285 = pneg %p126
        %p286 = pneg %p150
        %p287 = pneg %p147
        %p288 = pneg %p171
        %p289 = pneg %p168
        %p290 = pneg %p197
        %p291 = pneg %p194
        %s292 = sand.u32 %s184, 1
        %s293 = scalar_lea.sflag [#allocation4], %s292
        %s294 = sand.u32 %s184, 1
        %s295 = smul.addr %s294, 256
        %s296 = scalar_lea.vmem [#allocation5], %s295
        %v298 = vld [vmem:[%s266] sm:$0xff]
        %v299 = vld [vmem:[%s266 + $0x8] sm:$0xff]
        %v300 = vld [vmem:[%s266 + $0x10] sm:$0xff]
        %v301 = vld [vmem:[%s266 + $0x18] sm:$0xff]
        %v302 = vld [vmem:[%s266 + $0x20] sm:$0xff]
        %v303 = vld [vmem:[%s266 + $0x28] sm:$0xff]
        %v304 = vld [vmem:[%s266 + $0x30] sm:$0xff]
        %v305 = vld [vmem:[%s266 + $0x38] sm:$0xff]
        %v306 = vld [vmem:[%s266 + $0x40] sm:$0xff]
        %v307 = vld [vmem:[%s266 + $0x48] sm:$0xff]
        %v308 = vld [vmem:[%s266 + $0x50] sm:$0xff]
        %v309 = vld [vmem:[%s266 + $0x58] sm:$0xff]
        %v310 = vld [vmem:[%s266 + $0x60] sm:$0xff]
        %v311 = vld [vmem:[%s266 + $0x68] sm:$0xff]
        %v312 = vld [vmem:[%s266 + $0x70] sm:$0xff]
        %v313 = vld [vmem:[%s266 + $0x78] sm:$0xff]
        %v314 = vld [vmem:[%s266 + $0x80] sm:$0xff]
        %v315 = vld [vmem:[%s266 + $0x88] sm:$0xff]
        %v316 = vld [vmem:[%s266 + $0x90] sm:$0xff]
        %v317 = vld [vmem:[%s266 + $0x98] sm:$0xff]
        %v318 = vld [vmem:[%s266 + $0xa0] sm:$0xff]
        %v319 = vld [vmem:[%s266 + $0xa8] sm:$0xff]
        %v320 = vld [vmem:[%s266 + $0xb0] sm:$0xff]
        %v321 = vld [vmem:[%s266 + $0xb8] sm:$0xff]
        %v322 = vld [vmem:[%s266 + $0xc0] sm:$0xff]
        %v323 = vld [vmem:[%s266 + $0xc8] sm:$0xff]
        %v324 = vld [vmem:[%s266 + $0xd0] sm:$0xff]
        %v325 = vld [vmem:[%s266 + $0xd8] sm:$0xff]
        %v326 = vld [vmem:[%s266 + $0xe0] sm:$0xff]
        %v327 = vld [vmem:[%s266 + $0xe8] sm:$0xff]
        %v328 = vld [vmem:[%s266 + $0xf0] sm:$0xff]
        %v329 = vld [vmem:[%s266 + $0xf8] sm:$0xff]
        %v330 = vpack.c.bf16 %v299, %v298
        %v331 = vpack.c.bf16 %v301, %v300
        %v332 = vpack.c.bf16 %v303, %v302
        %v333 = vpack.c.bf16 %v305, %v304
        %v334 = vpack.c.bf16 %v307, %v306
        %v335 = vpack.c.bf16 %v309, %v308
        %v336 = vpack.c.bf16 %v311, %v310
        %v337 = vpack.c.bf16 %v313, %v312
        %v338 = vpack.c.bf16 %v315, %v314
        %v339 = vpack.c.bf16 %v317, %v316
        %v340 = vpack.c.bf16 %v319, %v318
        %v341 = vpack.c.bf16 %v321, %v320
        %v342 = vpack.c.bf16 %v323, %v322
        %v343 = vpack.c.bf16 %v325, %v324
        %v344 = vpack.c.bf16 %v327, %v326
        %v345 = vpack.c.bf16 %v329, %v328
        %v346 = vld [vmem:[%s1] sm:$0xf]
        %v347 = vld [vmem:[%s1 + $0x4] sm:$0xf]
        %v348 = vld [vmem:[%s1 + $0x8] sm:$0xf]
        %v349 = vld [vmem:[%s1 + $0xc] sm:$0xf]
        %v350 = vld [vmem:[%s1 + $0x10] sm:$0xf]
        %v351 = vld [vmem:[%s1 + $0x14] sm:$0xf]
        %v352 = vld [vmem:[%s1 + $0x18] sm:$0xf]
        %v353 = vld [vmem:[%s1 + $0x1c] sm:$0xf]
        %v354 = vld [vmem:[%s1 + $0x20] sm:$0xf]
        %v355 = vld [vmem:[%s1 + $0x24] sm:$0xf]
        %v356 = vld [vmem:[%s1 + $0x28] sm:$0xf]
        %v357 = vld [vmem:[%s1 + $0x2c] sm:$0xf]
        %v358 = vld [vmem:[%s1 + $0x30] sm:$0xf]
        %v359 = vld [vmem:[%s1 + $0x34] sm:$0xf]
        %v360 = vld [vmem:[%s1 + $0x38] sm:$0xf]
        %v361 = vld [vmem:[%s1 + $0x3c] sm:$0xf]
        %v362 = vld [vmem:[%s2] sm:$0x1]
        %v364 = vlaneseq
        %v365 = vshrl.u32 %v364, 7
        %v366 = vsub.s32 0, %v365
        %v367 = vrot.slane %v362, %v366
        %v385 = vunpack.c.l.b16 %v346
        %v386 = vunpack.c.l.b16 %v347
        %v387 = vunpack.c.l.b16 %v348
        %v388 = vunpack.c.l.b16 %v349
        %v389 = vunpack.c.l.b16 %v350
        %v390 = vunpack.c.l.b16 %v351
        %v391 = vunpack.c.l.b16 %v352
        %v392 = vunpack.c.l.b16 %v353
        %v393 = vunpack.c.l.b16 %v354
        %v394 = vunpack.c.l.b16 %v355
        %v395 = vunpack.c.l.b16 %v356
        %v396 = vunpack.c.l.b16 %v357
        %v397 = vunpack.c.l.b16 %v358
        %v398 = vunpack.c.l.b16 %v359
        %v399 = vunpack.c.l.b16 %v360
        %v400 = vunpack.c.l.b16 %v361
        %v401 = vpack.c.b16 %v386, %v385
        %v402 = vpack.c.b16 %v388, %v387
        %v403 = vpack.c.b16 %v390, %v389
        %v404 = vpack.c.b16 %v392, %v391
        %v405 = vpack.c.b16 %v394, %v393
        %v406 = vpack.c.b16 %v396, %v395
        %v407 = vpack.c.b16 %v398, %v397
        %v408 = vpack.c.b16 %v400, %v399
        %417 = vmatprep.subr.bf16.mxu0 0
        %418 = vmatpush1.bf16.msra.mxu0 %v401
        %419 = vmatprep.subr.bf16.mxu0 0
        %420 = vmatpush1.bf16.msra.mxu0 %v402
        %421 = vmatprep.subr.bf16.mxu0 0
        %422 = vmatpush1.bf16.msra.mxu0 %v403
        %423 = vmatprep.subr.bf16.mxu0 0
        %424 = vmatpush1.bf16.msra.mxu0 %v404
        %425 = vmatprep.subr.bf16.mxu0 0
        %426 = vmatpush1.bf16.msra.mxu0 %v405
        %427 = vmatprep.subr.bf16.mxu0 0
        %428 = vmatpush1.bf16.msra.mxu0 %v406
        %429 = vmatprep.subr.bf16.mxu0 0
        %430 = vmatpush1.bf16.msra.mxu0 %v407
        %431 = vmatprep.subr.bf16.mxu0 0
        %432 = vmatpush1.bf16.msra.mxu0 %v408
        %433 = vmatprep.subr.bf16.mxu0 0
        %434 = vmatpush1.bf16.msra.mxu0 0
        %435 = vmatprep.subr.bf16.mxu0 0
        %436 = vmatpush1.bf16.msra.mxu0 0
        %437 = vmatprep.subr.bf16.mxu0 0
        %438 = vmatpush1.bf16.msra.mxu0 0
        %439 = vmatprep.subr.bf16.mxu0 0
        %440 = vmatpush1.bf16.msra.mxu0 0
        %441 = vmatprep.subr.bf16.mxu0 0
        %442 = vmatpush1.bf16.msra.mxu0 0
        %443 = vmatprep.subr.bf16.mxu0 0
        %444 = vmatpush1.bf16.msra.mxu0 0
        %445 = vmatprep.subr.bf16.mxu0 0
        %446 = vmatpush1.bf16.msra.mxu0 0
        %447 = vmatprep.subr.bf16.mxu0 0
        %448 = vmatpush1.bf16.msra.mxu0 0
        %449 = vmatprep.mubr.bf16.mxu0 0
        %450 = vmatmul.mubr.bf16.gmra.mrb[0].mxu0 %v330
        %v451 = vpop.f32.mrb[0].mxu0
        %v452 = vadd.f32 %v367, %v451
        %v453 = vpop.f32.mrb[0].mxu0
        %v454 = vpop.f32.mrb[0].mxu0
        %v455 = vadd.f32 %v367, %v454
        %v456 = vpop.f32.mrb[0].mxu0
        %457 = vmatprep.mubr.bf16.mxu0 0
        %458 = vmatmul.mubr.bf16.gmra.mrb[0].mxu0 %v331
        %v459 = vpop.f32.mrb[0].mxu0
        %v460 = vadd.f32 %v367, %v459
        %v461 = vpop.f32.mrb[0].mxu0
        %v462 = vpop.f32.mrb[0].mxu0
        %v463 = vadd.f32 %v367, %v462
        %v464 = vpop.f32.mrb[0].mxu0
        %465 = vmatprep.mubr.bf16.mxu0 0
        %466 = vmatmul.mubr.bf16.gmra.mrb[0].mxu0 %v332
        %v467 = vpop.f32.mrb[0].mxu0
        %v468 = vadd.f32 %v367, %v467
        %v469 = vpop.f32.mrb[0].mxu0
        %v470 = vpop.f32.mrb[0].mxu0
        %v471 = vadd.f32 %v367, %v470
        %v472 = vpop.f32.mrb[0].mxu0
        %473 = vmatprep.mubr.bf16.mxu0 0
        %474 = vmatmul.mubr.bf16.gmra.mrb[0].mxu0 %v333
        %v475 = vpop.f32.mrb[0].mxu0
        %v476 = vadd.f32 %v367, %v475
        %v477 = vpop.f32.mrb[0].mxu0
        %v478 = vpop.f32.mrb[0].mxu0
        %v479 = vadd.f32 %v367, %v478
        %v480 = vpop.f32.mrb[0].mxu0
        %481 = vmatprep.mubr.bf16.mxu0 0
        %482 = vmatmul.mubr.bf16.gmra.mrb[0].mxu0 %v334
        %v483 = vpop.f32.mrb[0].mxu0
        %v484 = vadd.f32 %v367, %v483
        %v485 = vpop.f32.mrb[0].mxu0
        %v486 = vpop.f32.mrb[0].mxu0
        %v487 = vadd.f32 %v367, %v486
        %v488 = vpop.f32.mrb[0].mxu0
        %489 = vmatprep.mubr.bf16.mxu0 0
        %490 = vmatmul.mubr.bf16.gmra.mrb[0].mxu0 %v335
        %v491 = vpop.f32.mrb[0].mxu0
        %v492 = vadd.f32 %v367, %v491
        %v493 = vpop.f32.mrb[0].mxu0
        %v494 = vpop.f32.mrb[0].mxu0
        %v495 = vadd.f32 %v367, %v494
        %v496 = vpop.f32.mrb[0].mxu0
        %497 = vmatprep.mubr.bf16.mxu0 0
        %498 = vmatmul.mubr.bf16.gmra.mrb[0].mxu0 %v336
        %v499 = vpop.f32.mrb[0].mxu0
        %v500 = vadd.f32 %v367, %v499
        %v501 = vpop.f32.mrb[0].mxu0
        %v502 = vpop.f32.mrb[0].mxu0
        %v503 = vadd.f32 %v367, %v502
        %v504 = vpop.f32.mrb[0].mxu0
        %505 = vmatprep.mubr.bf16.mxu0 0
        %506 = vmatmul.mubr.bf16.gmra.mrb[0].mxu0 %v337
        %v507 = vpop.f32.mrb[0].mxu0
        %v508 = vadd.f32 %v367, %v507
        %v509 = vpop.f32.mrb[0].mxu0
        %v510 = vpop.f32.mrb[0].mxu0
        %v511 = vadd.f32 %v367, %v510
        %v512 = vpop.f32.mrb[0].mxu0
        %513 = vmatprep.mubr.bf16.mxu0 0
        %514 = vmatmul.mubr.bf16.gmra.mrb[0].mxu0 %v338
        %v515 = vpop.f32.mrb[0].mxu0
        %v516 = vadd.f32 %v367, %v515
        %v517 = vpop.f32.mrb[0].mxu0
        %v518 = vpop.f32.mrb[0].mxu0
        %v519 = vadd.f32 %v367, %v518
        %v520 = vpop.f32.mrb[0].mxu0
        %521 = vmatprep.mubr.bf16.mxu0 0
        %522 = vmatmul.mubr.bf16.gmra.mrb[0].mxu0 %v339
        %v523 = vpop.f32.mrb[0].mxu0
        %v524 = vadd.f32 %v367, %v523
        %v525 = vpop.f32.mrb[0].mxu0
        %v526 = vpop.f32.mrb[0].mxu0
        %v527 = vadd.f32 %v367, %v526
        %v528 = vpop.f32.mrb[0].mxu0
        %529 = vmatprep.mubr.bf16.mxu0 0
        %530 = vmatmul.mubr.bf16.gmra.mrb[0].mxu0 %v340
        %v531 = vpop.f32.mrb[0].mxu0
        %v532 = vadd.f32 %v367, %v531
        %v533 = vpop.f32.mrb[0].mxu0
        %v534 = vpop.f32.mrb[0].mxu0
        %v535 = vadd.f32 %v367, %v534
        %v536 = vpop.f32.mrb[0].mxu0
        %537 = vmatprep.mubr.bf16.mxu0 0
        %538 = vmatmul.mubr.bf16.gmra.mrb[0].mxu0 %v341
        %v539 = vpop.f32.mrb[0].mxu0
        %v540 = vadd.f32 %v367, %v539
        %v541 = vpop.f32.mrb[0].mxu0
        %v542 = vpop.f32.mrb[0].mxu0
        %v543 = vadd.f32 %v367, %v542
        %v544 = vpop.f32.mrb[0].mxu0
        %545 = vmatprep.mubr.bf16.mxu0 0
        %546 = vmatmul.mubr.bf16.gmra.mrb[0].mxu0 %v342
        %v547 = vpop.f32.mrb[0].mxu0
        %v548 = vadd.f32 %v367, %v547
        %v549 = vpop.f32.mrb[0].mxu0
        %v550 = vpop.f32.mrb[0].mxu0
        %v551 = vadd.f32 %v367, %v550
        %v552 = vpop.f32.mrb[0].mxu0
        %553 = vmatprep.mubr.bf16.mxu0 0
        %554 = vmatmul.mubr.bf16.gmra.mrb[0].mxu0 %v343
        %v555 = vpop.f32.mrb[0].mxu0
        %v556 = vadd.f32 %v367, %v555
        %v557 = vpop.f32.mrb[0].mxu0
        %v558 = vpop.f32.mrb[0].mxu0
        %v559 = vadd.f32 %v367, %v558
        %v560 = vpop.f32.mrb[0].mxu0
        %561 = vmatprep.mubr.bf16.mxu0 0
        %562 = vmatmul.mubr.bf16.gmra.mrb[0].mxu0 %v344
        %v563 = vpop.f32.mrb[0].mxu0
        %v564 = vadd.f32 %v367, %v563
        %v565 = vpop.f32.mrb[0].mxu0
        %v566 = vpop.f32.mrb[0].mxu0
        %v567 = vadd.f32 %v367, %v566
        %v568 = vpop.f32.mrb[0].mxu0
        %569 = vmatprep.mubr.bf16.mxu0 0
        %570 = vmatmul.mubr.bf16.gmra.mrb[0].mxu0 %v345
        %v571 = vpop.f32.mrb[0].mxu0
        %v572 = vadd.f32 %v367, %v571
        %v573 = vpop.f32.mrb[0].mxu0
        %v574 = vpop.f32.mrb[0].mxu0
        %v575 = vadd.f32 %v367, %v574
        %v576 = vpop.f32.mrb[0].mxu0
        %577 = vdwg.mxu0
        %v578 = vmax.f32 %v452, 0.0
        %v579 = vmax.f32 %v455, 0.0
        %v580 = vmax.f32 %v460, 0.0
        %v581 = vmax.f32 %v463, 0.0
        %v582 = vmax.f32 %v468, 0.0
        %v583 = vmax.f32 %v471, 0.0
        %v584 = vmax.f32 %v476, 0.0
        %v585 = vmax.f32 %v479, 0.0
        %v586 = vmax.f32 %v484, 0.0
        %v587 = vmax.f32 %v487, 0.0
        %v588 = vmax.f32 %v492, 0.0
        %v589 = vmax.f32 %v495, 0.0
        %v590 = vmax.f32 %v500, 0.0
        %v591 = vmax.f32 %v503, 0.0
        %v592 = vmax.f32 %v508, 0.0
        %v593 = vmax.f32 %v511, 0.0
        %v594 = vmax.f32 %v516, 0.0
        %v595 = vmax.f32 %v519, 0.0
        %v596 = vmax.f32 %v524, 0.0
        %v597 = vmax.f32 %v527, 0.0
        %v598 = vmax.f32 %v532, 0.0
        %v599 = vmax.f32 %v535, 0.0
        %v600 = vmax.f32 %v540, 0.0
        %v601 = vmax.f32 %v543, 0.0
        %v602 = vmax.f32 %v548, 0.0
        %v603 = vmax.f32 %v551, 0.0
        %v604 = vmax.f32 %v556, 0.0
        %v605 = vmax.f32 %v559, 0.0
        %v606 = vmax.f32 %v564, 0.0
        %v607 = vmax.f32 %v567, 0.0
        %v608 = vmax.f32 %v572, 0.0
        %v609 = vmax.f32 %v575, 0.0
        %vm642 = vcmask 1040384
        %v643 = vrot.slane %v578, 7
        %v644 = vrot.slane %v579, 7
        %v645 = vsel %vm642, %v643, %v644
        %v646 = vrot.slane %v580, 7
        %v647 = vrot.slane %v581, 7
        %v648 = vsel %vm642, %v646, %v647
        %v649 = vrot.slane %v582, 7
        %v650 = vrot.slane %v583, 7
        %v651 = vsel %vm642, %v649, %v650
        %v652 = vrot.slane %v584, 7
        %v653 = vrot.slane %v585, 7
        %v654 = vsel %vm642, %v652, %v653
        %v655 = vrot.slane %v586, 7
        %v656 = vrot.slane %v587, 7
        %v657 = vsel %vm642, %v655, %v656
        %v658 = vrot.slane %v588, 7
        %v659 = vrot.slane %v589, 7
        %v660 = vsel %vm642, %v658, %v659
        %v661 = vrot.slane %v590, 7
        %v662 = vrot.slane %v591, 7
        %v663 = vsel %vm642, %v661, %v662
        %v664 = vrot.slane %v592, 7
        %v665 = vrot.slane %v593, 7
        %v666 = vsel %vm642, %v664, %v665
        %v667 = vrot.slane %v594, 7
        %v668 = vrot.slane %v595, 7
        %v669 = vsel %vm642, %v667, %v668
        %v670 = vrot.slane %v596, 7
        %v671 = vrot.slane %v597, 7
        %v672 = vsel %vm642, %v670, %v671
        %v673 = vrot.slane %v598, 7
        %v674 = vrot.slane %v599, 7
        %v675 = vsel %vm642, %v673, %v674
        %v676 = vrot.slane %v600, 7
        %v677 = vrot.slane %v601, 7
        %v678 = vsel %vm642, %v676, %v677
        %v679 = vrot.slane %v602, 7
        %v680 = vrot.slane %v603, 7
        %v681 = vsel %vm642, %v679, %v680
        %v682 = vrot.slane %v604, 7
        %v683 = vrot.slane %v605, 7
        %v684 = vsel %vm642, %v682, %v683
        %v685 = vrot.slane %v606, 7
        %v686 = vrot.slane %v607, 7
        %v687 = vsel %vm642, %v685, %v686
        %v688 = vrot.slane %v608, 7
        %v689 = vrot.slane %v609, 7
        %v690 = vsel %vm642, %v688, %v689
        %v738 = vsel %vm642, 0.0, %v643
        %v739 = vsel %vm642, 0.0, %v646
        %v740 = vsel %vm642, 0.0, %v649
        %v741 = vsel %vm642, 0.0, %v652
        %v742 = vsel %vm642, 0.0, %v655
        %v743 = vsel %vm642, 0.0, %v658
        %v744 = vsel %vm642, 0.0, %v661
        %v745 = vsel %vm642, 0.0, %v664
        %v746 = vsel %vm642, 0.0, %v667
        %v747 = vsel %vm642, 0.0, %v670
        %v748 = vsel %vm642, 0.0, %v673
        %v749 = vsel %vm642, 0.0, %v676
        %v750 = vsel %vm642, 0.0, %v679
        %v751 = vsel %vm642, 0.0, %v682
        %v752 = vsel %vm642, 0.0, %v685
        %v753 = vsel %vm642, 0.0, %v688
        %v754 = vsel %vm642, %v644, 0.0
        %v755 = vsel %vm642, %v647, 0.0
        %v756 = vsel %vm642, %v650, 0.0
        %v757 = vsel %vm642, %v653, 0.0
        %v758 = vsel %vm642, %v656, 0.0
        %v759 = vsel %vm642, %v659, 0.0
        %v760 = vsel %vm642, %v662, 0.0
        %v761 = vsel %vm642, %v665, 0.0
        %v762 = vsel %vm642, %v668, 0.0
        %v763 = vsel %vm642, %v671, 0.0
        %v764 = vsel %vm642, %v674, 0.0
        %v765 = vsel %vm642, %v677, 0.0
        %v766 = vsel %vm642, %v680, 0.0
        %v767 = vsel %vm642, %v683, 0.0
        %v768 = vsel %vm642, %v686, 0.0
        %v769 = vsel %vm642, %v689, 0.0
        %vm801 = vcmask 1046528
        %v802 = vrot.slane 0.0, 1
        %v803 = vsel %vm801, %v802, %v802
        %v804 = vrot.slane %v738, 1
        %v805 = vrot.slane %v645, 1
        %v806 = vsel %vm801, %v804, %v805
        %v807 = vrot.slane %v754, 1
        %v808 = vsel %vm801, %v805, %v807
        %v809 = vrot.slane %v739, 1
        %v810 = vrot.slane %v648, 1
        %v811 = vsel %vm801, %v809, %v810
        %v812 = vrot.slane %v755, 1
        %v813 = vsel %vm801, %v810, %v812
        %v814 = vrot.slane %v740, 1
        %v815 = vrot.slane %v651, 1
        %v816 = vsel %vm801, %v814, %v815
        %v817 = vrot.slane %v756, 1
        %v818 = vsel %vm801, %v815, %v817
        %v819 = vrot.slane %v741, 1
        %v820 = vrot.slane %v654, 1
        %v821 = vsel %vm801, %v819, %v820
        %v822 = vrot.slane %v757, 1
        %v823 = vsel %vm801, %v820, %v822
        %v824 = vrot.slane %v742, 1
        %v825 = vrot.slane %v657, 1
        %v826 = vsel %vm801, %v824, %v825
        %v827 = vrot.slane %v758, 1
        %v828 = vsel %vm801, %v825, %v827
        %v829 = vrot.slane %v743, 1
        %v830 = vrot.slane %v660, 1
        %v831 = vsel %vm801, %v829, %v830
        %v832 = vrot.slane %v759, 1
        %v833 = vsel %vm801, %v830, %v832
        %v834 = vrot.slane %v744, 1
        %v835 = vrot.slane %v663, 1
        %v836 = vsel %vm801, %v834, %v835
        %v837 = vrot.slane %v760, 1
        %v838 = vsel %vm801, %v835, %v837
        %v839 = vrot.slane %v745, 1
        %v840 = vrot.slane %v666, 1
        %v841 = vsel %vm801, %v839, %v840
        %v842 = vrot.slane %v761, 1
        %v843 = vsel %vm801, %v840, %v842
        %v844 = vrot.slane %v746, 1
        %v845 = vrot.slane %v669, 1
        %v846 = vsel %vm801, %v844, %v845
        %v847 = vrot.slane %v762, 1
        %v848 = vsel %vm801, %v845, %v847
        %v849 = vrot.slane %v747, 1
        %v850 = vrot.slane %v672, 1
        %v851 = vsel %vm801, %v849, %v850
        %v852 = vrot.slane %v763, 1
        %v853 = vsel %vm801, %v850, %v852
        %v854 = vrot.slane %v748, 1
        %v855 = vrot.slane %v675, 1
        %v856 = vsel %vm801, %v854, %v855
        %v857 = vrot.slane %v764, 1
        %v858 = vsel %vm801, %v855, %v857
        %v859 = vrot.slane %v749, 1
        %v860 = vrot.slane %v678, 1
        %v861 = vsel %vm801, %v859, %v860
        %v862 = vrot.slane %v765, 1
        %v863 = vsel %vm801, %v860, %v862
        %v864 = vrot.slane %v750, 1
        %v865 = vrot.slane %v681, 1
        %v866 = vsel %vm801, %v864, %v865
        %v867 = vrot.slane %v766, 1
        %v868 = vsel %vm801, %v865, %v867
        %v869 = vrot.slane %v751, 1
        %v870 = vrot.slane %v684, 1
        %v871 = vsel %vm801, %v869, %v870
        %v872 = vrot.slane %v767, 1
        %v873 = vsel %vm801, %v870, %v872
        %v874 = vrot.slane %v752, 1
        %v875 = vrot.slane %v687, 1
        %v876 = vsel %vm801, %v874, %v875
        %v877 = vrot.slane %v768, 1
        %v878 = vsel %vm801, %v875, %v877
        %879 = vrot.lane.b32.xlu0 %v803, 32
        %v880 = vpop.permute.xlu0 %879
        %881 = vrot.lane.b32.xlu0 %v806, 32
        %v882 = vpop.permute.xlu0 %881
        %883 = vrot.lane.b32.xlu0 %v808, 32
        %v884 = vpop.permute.xlu0 %883
        %885 = vrot.lane.b32.xlu0 %v811, 32
        %v886 = vpop.permute.xlu0 %885
        %887 = vrot.lane.b32.xlu0 %v813, 32
        %v888 = vpop.permute.xlu0 %887
        %889 = vrot.lane.b32.xlu0 %v816, 32
        %v890 = vpop.permute.xlu0 %889
        %891 = vrot.lane.b32.xlu0 %v818, 32
        %v892 = vpop.permute.xlu0 %891
        %893 = vrot.lane.b32.xlu0 %v821, 32
        %v894 = vpop.permute.xlu0 %893
        %895 = vrot.lane.b32.xlu0 %v823, 32
        %v896 = vpop.permute.xlu0 %895
        %897 = vrot.lane.b32.xlu0 %v826, 32
        %v898 = vpop.permute.xlu0 %897
        %899 = vrot.lane.b32.xlu0 %v828, 32
        %v900 = vpop.permute.xlu0 %899
        %901 = vrot.lane.b32.xlu0 %v831, 32
        %v902 = vpop.permute.xlu0 %901
        %903 = vrot.lane.b32.xlu0 %v833, 32
        %v904 = vpop.permute.xlu0 %903
        %905 = vrot.lane.b32.xlu0 %v836, 32
        %v906 = vpop.permute.xlu0 %905
        %907 = vrot.lane.b32.xlu0 %v838, 32
        %v908 = vpop.permute.xlu0 %907
        %909 = vrot.lane.b32.xlu0 %v841, 32
        %v910 = vpop.permute.xlu0 %909
        %911 = vrot.lane.b32.xlu0 %v843, 32
        %v912 = vpop.permute.xlu0 %911
        %913 = vrot.lane.b32.xlu0 %v846, 32
        %v914 = vpop.permute.xlu0 %913
        %915 = vrot.lane.b32.xlu0 %v848, 32
        %v916 = vpop.permute.xlu0 %915
        %917 = vrot.lane.b32.xlu0 %v851, 32
        %v918 = vpop.permute.xlu0 %917
        %919 = vrot.lane.b32.xlu0 %v853, 32
        %v920 = vpop.permute.xlu0 %919
        %921 = vrot.lane.b32.xlu0 %v856, 32
        %v922 = vpop.permute.xlu0 %921
        %923 = vrot.lane.b32.xlu0 %v858, 32
        %v924 = vpop.permute.xlu0 %923
        %925 = vrot.lane.b32.xlu0 %v861, 32
        %v926 = vpop.permute.xlu0 %925
        %927 = vrot.lane.b32.xlu0 %v863, 32
        %v928 = vpop.permute.xlu0 %927
        %929 = vrot.lane.b32.xlu0 %v866, 32
        %v930 = vpop.permute.xlu0 %929
        %931 = vrot.lane.b32.xlu0 %v868, 32
        %v932 = vpop.permute.xlu0 %931
        %933 = vrot.lane.b32.xlu0 %v871, 32
        %v934 = vpop.permute.xlu0 %933
        %935 = vrot.lane.b32.xlu0 %v873, 32
        %v936 = vpop.permute.xlu0 %935
        %937 = vrot.lane.b32.xlu0 %v876, 32
        %v938 = vpop.permute.xlu0 %937
        %939 = vrot.lane.b32.xlu0 %v878, 32
        %v940 = vpop.permute.xlu0 %939
        %vm972 = vcmask 1045504
        %v973 = vrot.slane 0.0, 2
        %v974 = vsel %vm972, %v973, %v973
        %v975 = vrot.slane %v738, 2
        %v976 = vrot.slane %v645, 2
        %v977 = vsel %vm972, %v975, %v976
        %v978 = vrot.slane %v754, 2
        %v979 = vsel %vm972, %v976, %v978
        %v980 = vrot.slane %v739, 2
        %v981 = vrot.slane %v648, 2
        %v982 = vsel %vm972, %v980, %v981
        %v983 = vrot.slane %v755, 2
        %v984 = vsel %vm972, %v981, %v983
        %v985 = vrot.slane %v740, 2
        %v986 = vrot.slane %v651, 2
        %v987 = vsel %vm972, %v985, %v986
        %v988 = vrot.slane %v756, 2
        %v989 = vsel %vm972, %v986, %v988
        %v990 = vrot.slane %v741, 2
        %v991 = vrot.slane %v654, 2
        %v992 = vsel %vm972, %v990, %v991
        %v993 = vrot.slane %v757, 2
        %v994 = vsel %vm972, %v991, %v993
        %v995 = vrot.slane %v742, 2
        %v996 = vrot.slane %v657, 2
        %v997 = vsel %vm972, %v995, %v996
        %v998 = vrot.slane %v758, 2
        %v999 = vsel %vm972, %v996, %v998
        %v1000 = vrot.slane %v743, 2
        %v1001 = vrot.slane %v660, 2
        %v1002 = vsel %vm972, %v1000, %v1001
        %v1003 = vrot.slane %v759, 2
        %v1004 = vsel %vm972, %v1001, %v1003
        %v1005 = vrot.slane %v744, 2
        %v1006 = vrot.slane %v663, 2
        %v1007 = vsel %vm972, %v1005, %v1006
        %v1008 = vrot.slane %v760, 2
        %v1009 = vsel %vm972, %v1006, %v1008
        %v1010 = vrot.slane %v745, 2
        %v1011 = vrot.slane %v666, 2
        %v1012 = vsel %vm972, %v1010, %v1011
        %v1013 = vrot.slane %v761, 2
        %v1014 = vsel %vm972, %v1011, %v1013
        %v1015 = vrot.slane %v746, 2
        %v1016 = vrot.slane %v669, 2
        %v1017 = vsel %vm972, %v1015, %v1016
        %v1018 = vrot.slane %v762, 2
        %v1019 = vsel %vm972, %v1016, %v1018
        %v1020 = vrot.slane %v747, 2
        %v1021 = vrot.slane %v672, 2
        %v1022 = vsel %vm972, %v1020, %v1021
        %v1023 = vrot.slane %v763, 2
        %v1024 = vsel %vm972, %v1021, %v1023
        %v1025 = vrot.slane %v748, 2
        %v1026 = vrot.slane %v675, 2
        %v1027 = vsel %vm972, %v1025, %v1026
        %v1028 = vrot.slane %v764, 2
        %v1029 = vsel %vm972, %v1026, %v1028
        %v1030 = vrot.slane %v749, 2
        %v1031 = vrot.slane %v678, 2
        %v1032 = vsel %vm972, %v1030, %v1031
        %v1033 = vrot.slane %v765, 2
        %v1034 = vsel %vm972, %v1031, %v1033
        %v1035 = vrot.slane %v750, 2
        %v1036 = vrot.slane %v681, 2
        %v1037 = vsel %vm972, %v1035, %v1036
        %v1038 = vrot.slane %v766, 2
        %v1039 = vsel %vm972, %v1036, %v1038
        %v1040 = vrot.slane %v751, 2
        %v1041 = vrot.slane %v684, 2
        %v1042 = vsel %vm972, %v1040, %v1041
        %v1043 = vrot.slane %v767, 2
        %v1044 = vsel %vm972, %v1041, %v1043
        %v1045 = vrot.slane %v752, 2
        %v1046 = vrot.slane %v687, 2
        %v1047 = vsel %vm972, %v1045, %v1046
        %v1048 = vrot.slane %v768, 2
        %v1049 = vsel %vm972, %v1046, %v1048
        %1050 = vrot.lane.b32.xlu0 %v974, 64
        %v1051 = vpop.permute.xlu0 %1050
        %1052 = vrot.lane.b32.xlu0 %v977, 64
        %v1053 = vpop.permute.xlu0 %1052
        %1054 = vrot.lane.b32.xlu0 %v979, 64
        %v1055 = vpop.permute.xlu0 %1054
        %1056 = vrot.lane.b32.xlu0 %v982, 64
        %v1057 = vpop.permute.xlu0 %1056
        %1058 = vrot.lane.b32.xlu0 %v984, 64
        %v1059 = vpop.permute.xlu0 %1058
        %1060 = vrot.lane.b32.xlu0 %v987, 64
        %v1061 = vpop.permute.xlu0 %1060
        %1062 = vrot.lane.b32.xlu0 %v989, 64
        %v1063 = vpop.permute.xlu0 %1062
        %1064 = vrot.lane.b32.xlu0 %v992, 64
        %v1065 = vpop.permute.xlu0 %1064
        %1066 = vrot.lane.b32.xlu0 %v994, 64
        %v1067 = vpop.permute.xlu0 %1066
        %1068 = vrot.lane.b32.xlu0 %v997, 64
        %v1069 = vpop.permute.xlu0 %1068
        %1070 = vrot.lane.b32.xlu0 %v999, 64
        %v1071 = vpop.permute.xlu0 %1070
        %1072 = vrot.lane.b32.xlu0 %v1002, 64
        %v1073 = vpop.permute.xlu0 %1072
        %1074 = vrot.lane.b32.xlu0 %v1004, 64
        %v1075 = vpop.permute.xlu0 %1074
        %1076 = vrot.lane.b32.xlu0 %v1007, 64
        %v1077 = vpop.permute.xlu0 %1076
        %1078 = vrot.lane.b32.xlu0 %v1009, 64
        %v1079 = vpop.permute.xlu0 %1078
        %1080 = vrot.lane.b32.xlu0 %v1012, 64
        %v1081 = vpop.permute.xlu0 %1080
        %1082 = vrot.lane.b32.xlu0 %v1014, 64
        %v1083 = vpop.permute.xlu0 %1082
        %1084 = vrot.lane.b32.xlu0 %v1017, 64
        %v1085 = vpop.permute.xlu0 %1084
        %1086 = vrot.lane.b32.xlu0 %v1019, 64
        %v1087 = vpop.permute.xlu0 %1086
        %1088 = vrot.lane.b32.xlu0 %v1022, 64
        %v1089 = vpop.permute.xlu0 %1088
        %1090 = vrot.lane.b32.xlu0 %v1024, 64
        %v1091 = vpop.permute.xlu0 %1090
        %1092 = vrot.lane.b32.xlu0 %v1027, 64
        %v1093 = vpop.permute.xlu0 %1092
        %1094 = vrot.lane.b32.xlu0 %v1029, 64
        %v1095 = vpop.permute.xlu0 %1094
        %1096 = vrot.lane.b32.xlu0 %v1032, 64
        %v1097 = vpop.permute.xlu0 %1096
        %1098 = vrot.lane.b32.xlu0 %v1034, 64
        %v1099 = vpop.permute.xlu0 %1098
        %1100 = vrot.lane.b32.xlu0 %v1037, 64
        %v1101 = vpop.permute.xlu0 %1100
        %1102 = vrot.lane.b32.xlu0 %v1039, 64
        %v1103 = vpop.permute.xlu0 %1102
        %1104 = vrot.lane.b32.xlu0 %v1042, 64
        %v1105 = vpop.permute.xlu0 %1104
        %1106 = vrot.lane.b32.xlu0 %v1044, 64
        %v1107 = vpop.permute.xlu0 %1106
        %1108 = vrot.lane.b32.xlu0 %v1047, 64
        %v1109 = vpop.permute.xlu0 %1108
        %1110 = vrot.lane.b32.xlu0 %v1049, 64
        %v1111 = vpop.permute.xlu0 %1110
        %1144 = vrot.lane.b32.xlu0 %v738, 96
        %v1145 = vpop.permute.xlu0 %1144
        %1146 = vrot.lane.b32.xlu0 %v645, 96
        %v1147 = vpop.permute.xlu0 %1146
        %1148 = vrot.lane.b32.xlu0 %v739, 96
        %v1149 = vpop.permute.xlu0 %1148
        %1150 = vrot.lane.b32.xlu0 %v648, 96
        %v1151 = vpop.permute.xlu0 %1150
        %1152 = vrot.lane.b32.xlu0 %v740, 96
        %v1153 = vpop.permute.xlu0 %1152
        %1154 = vrot.lane.b32.xlu0 %v651, 96
        %v1155 = vpop.permute.xlu0 %1154
        %1156 = vrot.lane.b32.xlu0 %v741, 96
        %v1157 = vpop.permute.xlu0 %1156
        %1158 = vrot.lane.b32.xlu0 %v654, 96
        %v1159 = vpop.permute.xlu0 %1158
        %1160 = vrot.lane.b32.xlu0 %v742, 96
        %v1161 = vpop.permute.xlu0 %1160
        %1162 = vrot.lane.b32.xlu0 %v657, 96
        %v1163 = vpop.permute.xlu0 %1162
        %1164 = vrot.lane.b32.xlu0 %v743, 96
        %v1165 = vpop.permute.xlu0 %1164
        %1166 = vrot.lane.b32.xlu0 %v660, 96
        %v1167 = vpop.permute.xlu0 %1166
        %1168 = vrot.lane.b32.xlu0 %v744, 96
        %v1169 = vpop.permute.xlu0 %1168
        %1170 = vrot.lane.b32.xlu0 %v663, 96
        %v1171 = vpop.permute.xlu0 %1170
        %1172 = vrot.lane.b32.xlu0 %v745, 96
        %v1173 = vpop.permute.xlu0 %1172
        %1174 = vrot.lane.b32.xlu0 %v666, 96
        %v1175 = vpop.permute.xlu0 %1174
        %1176 = vrot.lane.b32.xlu0 %v746, 96
        %v1177 = vpop.permute.xlu0 %1176
        %1178 = vrot.lane.b32.xlu0 %v669, 96
        %v1179 = vpop.permute.xlu0 %1178
        %1180 = vrot.lane.b32.xlu0 %v747, 96
        %v1181 = vpop.permute.xlu0 %1180
        %1182 = vrot.lane.b32.xlu0 %v672, 96
        %v1183 = vpop.permute.xlu0 %1182
        %1184 = vrot.lane.b32.xlu0 %v748, 96
        %v1185 = vpop.permute.xlu0 %1184
        %1186 = vrot.lane.b32.xlu0 %v675, 96
        %v1187 = vpop.permute.xlu0 %1186
        %1188 = vrot.lane.b32.xlu0 %v749, 96
        %v1189 = vpop.permute.xlu0 %1188
        %1190 = vrot.lane.b32.xlu0 %v678, 96
        %v1191 = vpop.permute.xlu0 %1190
        %1192 = vrot.lane.b32.xlu0 %v750, 96
        %v1193 = vpop.permute.xlu0 %1192
        %1194 = vrot.lane.b32.xlu0 %v681, 96
        %v1195 = vpop.permute.xlu0 %1194
        %1196 = vrot.lane.b32.xlu0 %v751, 96
        %v1197 = vpop.permute.xlu0 %1196
        %1198 = vrot.lane.b32.xlu0 %v684, 96
        %v1199 = vpop.permute.xlu0 %1198
        %1200 = vrot.lane.b32.xlu0 %v752, 96
        %v1201 = vpop.permute.xlu0 %1200
        %1202 = vrot.lane.b32.xlu0 %v687, 96
        %v1203 = vpop.permute.xlu0 %1202
        %1204 = vrot.lane.b32.xlu0 %v753, 96
        %v1205 = vpop.permute.xlu0 %1204
        %1206 = vrot.lane.b32.xlu0 %v690, 96
        %v1207 = vpop.permute.xlu0 %1206
        %v1241 = vrot.slane %v753, 1
        %v1242 = vrot.slane %v690, 1
        %v1243 = vsel %vm801, %v1241, %v1242
        %v1244 = vrot.slane %v769, 1
        %v1245 = vsel %vm801, %v1242, %v1244
        %v1278 = vrot.slane %v753, 2
        %v1279 = vrot.slane %v690, 2
        %v1280 = vsel %vm972, %v1278, %v1279
        %v1281 = vrot.slane %v769, 2
        %v1282 = vsel %vm972, %v1279, %v1281
        %1283 = vrot.lane.b32.xlu0 %v977, 32
        %v1284 = vpop.permute.xlu0 %1283
        %1285 = vrot.lane.b32.xlu0 %v979, 32
        %v1286 = vpop.permute.xlu0 %1285
        %1287 = vrot.lane.b32.xlu0 %v982, 32
        %v1288 = vpop.permute.xlu0 %1287
        %1289 = vrot.lane.b32.xlu0 %v984, 32
        %v1290 = vpop.permute.xlu0 %1289
        %1291 = vrot.lane.b32.xlu0 %v987, 32
        %v1292 = vpop.permute.xlu0 %1291
        %1293 = vrot.lane.b32.xlu0 %v989, 32
        %v1294 = vpop.permute.xlu0 %1293
        %1295 = vrot.lane.b32.xlu0 %v992, 32
        %v1296 = vpop.permute.xlu0 %1295
        %1297 = vrot.lane.b32.xlu0 %v994, 32
        %v1298 = vpop.permute.xlu0 %1297
        %1299 = vrot.lane.b32.xlu0 %v997, 32
        %v1300 = vpop.permute.xlu0 %1299
        %1301 = vrot.lane.b32.xlu0 %v999, 32
        %v1302 = vpop.permute.xlu0 %1301
        %1303 = vrot.lane.b32.xlu0 %v1002, 32
        %v1304 = vpop.permute.xlu0 %1303
        %1305 = vrot.lane.b32.xlu0 %v1004, 32
        %v1306 = vpop.permute.xlu0 %1305
        %1307 = vrot.lane.b32.xlu0 %v1007, 32
        %v1308 = vpop.permute.xlu0 %1307
        %1309 = vrot.lane.b32.xlu0 %v1009, 32
        %v1310 = vpop.permute.xlu0 %1309
        %1311 = vrot.lane.b32.xlu0 %v1012, 32
        %v1312 = vpop.permute.xlu0 %1311
        %1313 = vrot.lane.b32.xlu0 %v1014, 32
        %v1314 = vpop.permute.xlu0 %1313
        %1315 = vrot.lane.b32.xlu0 %v1017, 32
        %v1316 = vpop.permute.xlu0 %1315
        %1317 = vrot.lane.b32.xlu0 %v1019, 32
        %v1318 = vpop.permute.xlu0 %1317
        %1319 = vrot.lane.b32.xlu0 %v1022, 32
        %v1320 = vpop.permute.xlu0 %1319
        %1321 = vrot.lane.b32.xlu0 %v1024, 32
        %v1322 = vpop.permute.xlu0 %1321
        %1323 = vrot.lane.b32.xlu0 %v1027, 32
        %v1324 = vpop.permute.xlu0 %1323
        %1325 = vrot.lane.b32.xlu0 %v1029, 32
        %v1326 = vpop.permute.xlu0 %1325
        %1327 = vrot.lane.b32.xlu0 %v1032, 32
        %v1328 = vpop.permute.xlu0 %1327
        %1329 = vrot.lane.b32.xlu0 %v1034, 32
        %v1330 = vpop.permute.xlu0 %1329
        %1331 = vrot.lane.b32.xlu0 %v1037, 32
        %v1332 = vpop.permute.xlu0 %1331
        %1333 = vrot.lane.b32.xlu0 %v1039, 32
        %v1334 = vpop.permute.xlu0 %1333
        %1335 = vrot.lane.b32.xlu0 %v1042, 32
        %v1336 = vpop.permute.xlu0 %1335
        %1337 = vrot.lane.b32.xlu0 %v1044, 32
        %v1338 = vpop.permute.xlu0 %1337
        %1339 = vrot.lane.b32.xlu0 %v1047, 32
        %v1340 = vpop.permute.xlu0 %1339
        %1341 = vrot.lane.b32.xlu0 %v1049, 32
        %v1342 = vpop.permute.xlu0 %1341
        %1343 = vrot.lane.b32.xlu0 %v1280, 32
        %v1344 = vpop.permute.xlu0 %1343
        %1345 = vrot.lane.b32.xlu0 %v1282, 32
        %v1346 = vpop.permute.xlu0 %1345
        %1379 = vrot.lane.b32.xlu0 %v739, 64
        %v1380 = vpop.permute.xlu0 %1379
        %1381 = vrot.lane.b32.xlu0 %v648, 64
        %v1382 = vpop.permute.xlu0 %1381
        %1383 = vrot.lane.b32.xlu0 %v740, 64
        %v1384 = vpop.permute.xlu0 %1383
        %1385 = vrot.lane.b32.xlu0 %v651, 64
        %v1386 = vpop.permute.xlu0 %1385
        %1387 = vrot.lane.b32.xlu0 %v741, 64
        %v1388 = vpop.permute.xlu0 %1387
        %1389 = vrot.lane.b32.xlu0 %v654, 64
        %v1390 = vpop.permute.xlu0 %1389
        %1391 = vrot.lane.b32.xlu0 %v742, 64
        %v1392 = vpop.permute.xlu0 %1391
        %1393 = vrot.lane.b32.xlu0 %v657, 64
        %v1394 = vpop.permute.xlu0 %1393
        %1395 = vrot.lane.b32.xlu0 %v743, 64
        %v1396 = vpop.permute.xlu0 %1395
        %1397 = vrot.lane.b32.xlu0 %v660, 64
        %v1398 = vpop.permute.xlu0 %1397
        %1399 = vrot.lane.b32.xlu0 %v744, 64
        %v1400 = vpop.permute.xlu0 %1399
        %1401 = vrot.lane.b32.xlu0 %v663, 64
        %v1402 = vpop.permute.xlu0 %1401
        %1403 = vrot.lane.b32.xlu0 %v745, 64
        %v1404 = vpop.permute.xlu0 %1403
        %1405 = vrot.lane.b32.xlu0 %v666, 64
        %v1406 = vpop.permute.xlu0 %1405
        %1407 = vrot.lane.b32.xlu0 %v746, 64
        %v1408 = vpop.permute.xlu0 %1407
        %1409 = vrot.lane.b32.xlu0 %v669, 64
        %v1410 = vpop.permute.xlu0 %1409
        %1411 = vrot.lane.b32.xlu0 %v747, 64
        %v1412 = vpop.permute.xlu0 %1411
        %1413 = vrot.lane.b32.xlu0 %v672, 64
        %v1414 = vpop.permute.xlu0 %1413
        %1415 = vrot.lane.b32.xlu0 %v748, 64
        %v1416 = vpop.permute.xlu0 %1415
        %1417 = vrot.lane.b32.xlu0 %v675, 64
        %v1418 = vpop.permute.xlu0 %1417
        %1419 = vrot.lane.b32.xlu0 %v749, 64
        %v1420 = vpop.permute.xlu0 %1419
        %1421 = vrot.lane.b32.xlu0 %v678, 64
        %v1422 = vpop.permute.xlu0 %1421
        %1423 = vrot.lane.b32.xlu0 %v750, 64
        %v1424 = vpop.permute.xlu0 %1423
        %1425 = vrot.lane.b32.xlu0 %v681, 64
        %v1426 = vpop.permute.xlu0 %1425
        %1427 = vrot.lane.b32.xlu0 %v751, 64
        %v1428 = vpop.permute.xlu0 %1427
        %1429 = vrot.lane.b32.xlu0 %v684, 64
        %v1430 = vpop.permute.xlu0 %1429
        %1431 = vrot.lane.b32.xlu0 %v752, 64
        %v1432 = vpop.permute.xlu0 %1431
        %1433 = vrot.lane.b32.xlu0 %v687, 64
        %v1434 = vpop.permute.xlu0 %1433
        %1435 = vrot.lane.b32.xlu0 %v753, 64
        %v1436 = vpop.permute.xlu0 %1435
        %1437 = vrot.lane.b32.xlu0 %v690, 64
        %v1438 = vpop.permute.xlu0 %1437
        %1439 = vrot.lane.b32.xlu0 0.0, 64
        %v1440 = vpop.permute.xlu0 %1439
        %1472 = vrot.lane.b32.xlu0 %v811, 96
        %v1473 = vpop.permute.xlu0 %1472
        %1474 = vrot.lane.b32.xlu0 %v813, 96
        %v1475 = vpop.permute.xlu0 %1474
        %1476 = vrot.lane.b32.xlu0 %v816, 96
        %v1477 = vpop.permute.xlu0 %1476
        %1478 = vrot.lane.b32.xlu0 %v818, 96
        %v1479 = vpop.permute.xlu0 %1478
        %1480 = vrot.lane.b32.xlu0 %v821, 96
        %v1481 = vpop.permute.xlu0 %1480
        %1482 = vrot.lane.b32.xlu0 %v823, 96
        %v1483 = vpop.permute.xlu0 %1482
        %1484 = vrot.lane.b32.xlu0 %v826, 96
        %v1485 = vpop.permute.xlu0 %1484
        %1486 = vrot.lane.b32.xlu0 %v828, 96
        %v1487 = vpop.permute.xlu0 %1486
        %1488 = vrot.lane.b32.xlu0 %v831, 96
        %v1489 = vpop.permute.xlu0 %1488
        %1490 = vrot.lane.b32.xlu0 %v833, 96
        %v1491 = vpop.permute.xlu0 %1490
        %1492 = vrot.lane.b32.xlu0 %v836, 96
        %v1493 = vpop.permute.xlu0 %1492
        %1494 = vrot.lane.b32.xlu0 %v838, 96
        %v1495 = vpop.permute.xlu0 %1494
        %1496 = vrot.lane.b32.xlu0 %v841, 96
        %v1497 = vpop.permute.xlu0 %1496
        %1498 = vrot.lane.b32.xlu0 %v843, 96
        %v1499 = vpop.permute.xlu0 %1498
        %1500 = vrot.lane.b32.xlu0 %v846, 96
        %v1501 = vpop.permute.xlu0 %1500
        %1502 = vrot.lane.b32.xlu0 %v848, 96
        %v1503 = vpop.permute.xlu0 %1502
        %1504 = vrot.lane.b32.xlu0 %v851, 96
        %v1505 = vpop.permute.xlu0 %1504
        %1506 = vrot.lane.b32.xlu0 %v853, 96
        %v1507 = vpop.permute.xlu0 %1506
        %1508 = vrot.lane.b32.xlu0 %v856, 96
        %v1509 = vpop.permute.xlu0 %1508
        %1510 = vrot.lane.b32.xlu0 %v858, 96
        %v1511 = vpop.permute.xlu0 %1510
        %1512 = vrot.lane.b32.xlu0 %v861, 96
        %v1513 = vpop.permute.xlu0 %1512
        %1514 = vrot.lane.b32.xlu0 %v863, 96
        %v1515 = vpop.permute.xlu0 %1514
        %1516 = vrot.lane.b32.xlu0 %v866, 96
        %v1517 = vpop.permute.xlu0 %1516
        %1518 = vrot.lane.b32.xlu0 %v868, 96
        %v1519 = vpop.permute.xlu0 %1518
        %1520 = vrot.lane.b32.xlu0 %v871, 96
        %v1521 = vpop.permute.xlu0 %1520
        %1522 = vrot.lane.b32.xlu0 %v873, 96
        %v1523 = vpop.permute.xlu0 %1522
        %1524 = vrot.lane.b32.xlu0 %v876, 96
        %v1525 = vpop.permute.xlu0 %1524
        %1526 = vrot.lane.b32.xlu0 %v878, 96
        %v1527 = vpop.permute.xlu0 %1526
        %1528 = vrot.lane.b32.xlu0 %v1243, 96
        %v1529 = vpop.permute.xlu0 %1528
        %1530 = vrot.lane.b32.xlu0 %v1245, 96
        %v1531 = vpop.permute.xlu0 %1530
        %1532 = vrot.lane.b32.xlu0 %v803, 96
        %v1533 = vpop.permute.xlu0 %1532
        %vm1596 = vcmask 261120
        %v1597 = vsel %vm1596, 0.0, %v880
        %v1598 = vsel %vm1596, %v738, %v882
        %v1599 = vsel %vm1596, %v645, %v884
        %v1600 = vsel %vm1596, %v739, %v886
        %v1601 = vsel %vm1596, %v648, %v888
        %v1602 = vsel %vm1596, %v740, %v890
        %v1603 = vsel %vm1596, %v651, %v892
        %v1604 = vsel %vm1596, %v741, %v894
        %v1605 = vsel %vm1596, %v654, %v896
        %v1606 = vsel %vm1596, %v742, %v898
        %v1607 = vsel %vm1596, %v657, %v900
        %v1608 = vsel %vm1596, %v743, %v902
        %v1609 = vsel %vm1596, %v660, %v904
        %v1610 = vsel %vm1596, %v744, %v906
        %v1611 = vsel %vm1596, %v663, %v908
        %v1612 = vsel %vm1596, %v745, %v910
        %v1613 = vsel %vm1596, %v666, %v912
        %v1614 = vsel %vm1596, %v746, %v914
        %v1615 = vsel %vm1596, %v669, %v916
        %v1616 = vsel %vm1596, %v747, %v918
        %v1617 = vsel %vm1596, %v672, %v920
        %v1618 = vsel %vm1596, %v748, %v922
        %v1619 = vsel %vm1596, %v675, %v924
        %v1620 = vsel %vm1596, %v749, %v926
        %v1621 = vsel %vm1596, %v678, %v928
        %v1622 = vsel %vm1596, %v750, %v930
        %v1623 = vsel %vm1596, %v681, %v932
        %v1624 = vsel %vm1596, %v751, %v934
        %v1625 = vsel %vm1596, %v684, %v936
        %v1626 = vsel %vm1596, %v752, %v938
        %v1627 = vsel %vm1596, %v687, %v940
        %vm1628 = vcmask 523264
        %v1629 = vsel %vm1628, %v1597, %v1051
        %v1630 = vsel %vm1628, %v1598, %v1053
        %v1631 = vsel %vm1628, %v1599, %v1055
        %v1632 = vsel %vm1628, %v1600, %v1057
        %v1633 = vsel %vm1628, %v1601, %v1059
        %v1634 = vsel %vm1628, %v1602, %v1061
        %v1635 = vsel %vm1628, %v1603, %v1063
        %v1636 = vsel %vm1628, %v1604, %v1065
        %v1637 = vsel %vm1628, %v1605, %v1067
        %v1638 = vsel %vm1628, %v1606, %v1069
        %v1639 = vsel %vm1628, %v1607, %v1071
        %v1640 = vsel %vm1628, %v1608, %v1073
        %v1641 = vsel %vm1628, %v1609, %v1075
        %v1642 = vsel %vm1628, %v1610, %v1077
        %v1643 = vsel %vm1628, %v1611, %v1079
        %v1644 = vsel %vm1628, %v1612, %v1081
        %v1645 = vsel %vm1628, %v1613, %v1083
        %v1646 = vsel %vm1628, %v1614, %v1085
        %v1647 = vsel %vm1628, %v1615, %v1087
        %v1648 = vsel %vm1628, %v1616, %v1089
        %v1649 = vsel %vm1628, %v1617, %v1091
        %v1650 = vsel %vm1628, %v1618, %v1093
        %v1651 = vsel %vm1628, %v1619, %v1095
        %v1652 = vsel %vm1628, %v1620, %v1097
        %v1653 = vsel %vm1628, %v1621, %v1099
        %v1654 = vsel %vm1628, %v1622, %v1101
        %v1655 = vsel %vm1628, %v1623, %v1103
        %v1656 = vsel %vm1628, %v1624, %v1105
        %v1657 = vsel %vm1628, %v1625, %v1107
        %v1658 = vsel %vm1628, %v1626, %v1109
        %v1659 = vsel %vm1628, %v1627, %v1111
        %vm1660 = vcmask 785408
        %v1661 = vsel %vm1660, %v1629, %v1145
        %v1662 = vsel %vm1660, %v1629, %v1147
        %v1663 = vsel %vm1660, %v1630, %v1149
        %v1664 = vsel %vm1660, %v1631, %v1151
        %v1665 = vsel %vm1660, %v1632, %v1153
        %v1666 = vsel %vm1660, %v1633, %v1155
        %v1667 = vsel %vm1660, %v1634, %v1157
        %v1668 = vsel %vm1660, %v1635, %v1159
        %v1669 = vsel %vm1660, %v1636, %v1161
        %v1670 = vsel %vm1660, %v1637, %v1163
        %v1671 = vsel %vm1660, %v1638, %v1165
        %v1672 = vsel %vm1660, %v1639, %v1167
        %v1673 = vsel %vm1660, %v1640, %v1169
        %v1674 = vsel %vm1660, %v1641, %v1171
        %v1675 = vsel %vm1660, %v1642, %v1173
        %v1676 = vsel %vm1660, %v1643, %v1175
        %v1677 = vsel %vm1660, %v1644, %v1177
        %v1678 = vsel %vm1660, %v1645, %v1179
        %v1679 = vsel %vm1660, %v1646, %v1181
        %v1680 = vsel %vm1660, %v1647, %v1183
        %v1681 = vsel %vm1660, %v1648, %v1185
        %v1682 = vsel %vm1660, %v1649, %v1187
        %v1683 = vsel %vm1660, %v1650, %v1189
        %v1684 = vsel %vm1660, %v1651, %v1191
        %v1685 = vsel %vm1660, %v1652, %v1193
        %v1686 = vsel %vm1660, %v1653, %v1195
        %v1687 = vsel %vm1660, %v1654, %v1197
        %v1688 = vsel %vm1660, %v1655, %v1199
        %v1689 = vsel %vm1660, %v1656, %v1201
        %v1690 = vsel %vm1660, %v1657, %v1203
        %v1691 = vsel %vm1660, %v1658, %v1205
        %v1692 = vsel %vm1660, %v1659, %v1207
        %v1693 = vsel %vm1596, %v806, %v1284
        %v1694 = vsel %vm1596, %v808, %v1286
        %v1695 = vsel %vm1596, %v811, %v1288
        %v1696 = vsel %vm1596, %v813, %v1290
        %v1697 = vsel %vm1596, %v816, %v1292
        %v1698 = vsel %vm1596, %v818, %v1294
        %v1699 = vsel %vm1596, %v821, %v1296
        %v1700 = vsel %vm1596, %v823, %v1298
        %v1701 = vsel %vm1596, %v826, %v1300
        %v1702 = vsel %vm1596, %v828, %v1302
        %v1703 = vsel %vm1596, %v831, %v1304
        %v1704 = vsel %vm1596, %v833, %v1306
        %v1705 = vsel %vm1596, %v836, %v1308
        %v1706 = vsel %vm1596, %v838, %v1310
        %v1707 = vsel %vm1596, %v841, %v1312
        %v1708 = vsel %vm1596, %v843, %v1314
        %v1709 = vsel %vm1596, %v846, %v1316
        %v1710 = vsel %vm1596, %v848, %v1318
        %v1711 = vsel %vm1596, %v851, %v1320
        %v1712 = vsel %vm1596, %v853, %v1322
        %v1713 = vsel %vm1596, %v856, %v1324
        %v1714 = vsel %vm1596, %v858, %v1326
        %v1715 = vsel %vm1596, %v861, %v1328
        %v1716 = vsel %vm1596, %v863, %v1330
        %v1717 = vsel %vm1596, %v866, %v1332
        %v1718 = vsel %vm1596, %v868, %v1334
        %v1719 = vsel %vm1596, %v871, %v1336
        %v1720 = vsel %vm1596, %v873, %v1338
        %v1721 = vsel %vm1596, %v876, %v1340
        %v1722 = vsel %vm1596, %v878, %v1342
        %v1723 = vsel %vm1596, %v1243, %v1344
        %v1724 = vsel %vm1596, %v1245, %v1346
        %v1725 = vsel %vm1628, %v1693, %v1380
        %v1726 = vsel %vm1628, %v1694, %v1382
        %v1727 = vsel %vm1628, %v1695, %v1384
        %v1728 = vsel %vm1628, %v1696, %v1386
        %v1729 = vsel %vm1628, %v1697, %v1388
        %v1730 = vsel %vm1628, %v1698, %v1390
        %v1731 = vsel %vm1628, %v1699, %v1392
        %v1732 = vsel %vm1628, %v1700, %v1394
        %v1733 = vsel %vm1628, %v1701, %v1396
        %v1734 = vsel %vm1628, %v1702, %v1398
        %v1735 = vsel %vm1628, %v1703, %v1400
        %v1736 = vsel %vm1628, %v1704, %v1402
        %v1737 = vsel %vm1628, %v1705, %v1404
        %v1738 = vsel %vm1628, %v1706, %v1406
        %v1739 = vsel %vm1628, %v1707, %v1408
        %v1740 = vsel %vm1628, %v1708, %v1410
        %v1741 = vsel %vm1628, %v1709, %v1412
        %v1742 = vsel %vm1628, %v1710, %v1414
        %v1743 = vsel %vm1628, %v1711, %v1416
        %v1744 = vsel %vm1628, %v1712, %v1418
        %v1745 = vsel %vm1628, %v1713, %v1420
        %v1746 = vsel %vm1628, %v1714, %v1422
        %v1747 = vsel %vm1628, %v1715, %v1424
        %v1748 = vsel %vm1628, %v1716, %v1426
        %v1749 = vsel %vm1628, %v1717, %v1428
        %v1750 = vsel %vm1628, %v1718, %v1430
        %v1751 = vsel %vm1628, %v1719, %v1432
        %v1752 = vsel %vm1628, %v1720, %v1434
        %v1753 = vsel %vm1628, %v1721, %v1436
        %v1754 = vsel %vm1628, %v1722, %v1438
        %v1755 = vsel %vm1628, %v1723, %v1440
        %v1756 = vsel %vm1628, %v1724, %v1440
        %v1757 = vsel %vm1660, %v1725, %v1473
        %v1758 = vsel %vm1660, %v1726, %v1475
        %v1759 = vsel %vm1660, %v1727, %v1477
        %v1760 = vsel %vm1660, %v1728, %v1479
        %v1761 = vsel %vm1660, %v1729, %v1481
        %v1762 = vsel %vm1660, %v1730, %v1483
        %v1763 = vsel %vm1660, %v1731, %v1485
        %v1764 = vsel %vm1660, %v1732, %v1487
        %v1765 = vsel %vm1660, %v1733, %v1489
        %v1766 = vsel %vm1660, %v1734, %v1491
        %v1767 = vsel %vm1660, %v1735, %v1493
        %v1768 = vsel %vm1660, %v1736, %v1495
        %v1769 = vsel %vm1660, %v1737, %v1497
        %v1770 = vsel %vm1660, %v1738, %v1499
        %v1771 = vsel %vm1660, %v1739, %v1501
        %v1772 = vsel %vm1660, %v1740, %v1503
        %v1773 = vsel %vm1660, %v1741, %v1505
        %v1774 = vsel %vm1660, %v1742, %v1507
        %v1775 = vsel %vm1660, %v1743, %v1509
        %v1776 = vsel %vm1660, %v1744, %v1511
        %v1777 = vsel %vm1660, %v1745, %v1513
        %v1778 = vsel %vm1660, %v1746, %v1515
        %v1779 = vsel %vm1660, %v1747, %v1517
        %v1780 = vsel %vm1660, %v1748, %v1519
        %v1781 = vsel %vm1660, %v1749, %v1521
        %v1782 = vsel %vm1660, %v1750, %v1523
        %v1783 = vsel %vm1660, %v1751, %v1525
        %v1784 = vsel %vm1660, %v1752, %v1527
        %v1785 = vsel %vm1660, %v1753, %v1529
        %v1786 = vsel %vm1660, %v1754, %v1531
        %v1787 = vsel %vm1660, %v1755, %v1533
        %v1788 = vsel %vm1660, %v1756, %v1533
        %v1789 = vpack.c.bf16 %v1662, %v1661
        %v1790 = vpack.c.bf16 %v1758, %v1757
        %v1791 = vpack.c.bf16 %v984, %v982
        %v1792 = vpack.c.bf16 %v1664, %v1663
        %v1793 = vpack.c.bf16 %v1760, %v1759
        %v1794 = vpack.c.bf16 %v989, %v987
        %v1795 = vpack.c.bf16 %v1666, %v1665
        %v1796 = vpack.c.bf16 %v1762, %v1761
        %v1797 = vpack.c.bf16 %v994, %v992
        %v1798 = vpack.c.bf16 %v1668, %v1667
        %v1799 = vpack.c.bf16 %v1764, %v1763
        %v1800 = vpack.c.bf16 %v999, %v997
        %v1801 = vpack.c.bf16 %v1670, %v1669
        %v1802 = vpack.c.bf16 %v1766, %v1765
        %v1803 = vpack.c.bf16 %v1004, %v1002
        %v1804 = vpack.c.bf16 %v1672, %v1671
        %v1805 = vpack.c.bf16 %v1768, %v1767
        %v1806 = vpack.c.bf16 %v1009, %v1007
        %v1807 = vpack.c.bf16 %v1674, %v1673
        %v1808 = vpack.c.bf16 %v1770, %v1769
        %v1809 = vpack.c.bf16 %v1014, %v1012
        %v1810 = vpack.c.bf16 %v1676, %v1675
        %v1811 = vpack.c.bf16 %v1772, %v1771
        %v1812 = vpack.c.bf16 %v1019, %v1017
        %v1813 = vpack.c.bf16 %v1678, %v1677
        %v1814 = vpack.c.bf16 %v1774, %v1773
        %v1815 = vpack.c.bf16 %v1024, %v1022
        %v1816 = vpack.c.bf16 %v1680, %v1679
        %v1817 = vpack.c.bf16 %v1776, %v1775
        %v1818 = vpack.c.bf16 %v1029, %v1027
        %v1819 = vpack.c.bf16 %v1682, %v1681
        %v1820 = vpack.c.bf16 %v1778, %v1777
        %v1821 = vpack.c.bf16 %v1034, %v1032
        %v1822 = vpack.c.bf16 %v1684, %v1683
        %v1823 = vpack.c.bf16 %v1780, %v1779
        %v1824 = vpack.c.bf16 %v1039, %v1037
        %v1825 = vpack.c.bf16 %v1686, %v1685
        %v1826 = vpack.c.bf16 %v1782, %v1781
        %v1827 = vpack.c.bf16 %v1044, %v1042
        %v1828 = vpack.c.bf16 %v1688, %v1687
        %v1829 = vpack.c.bf16 %v1784, %v1783
        %v1830 = vpack.c.bf16 %v1049, %v1047
        %v1831 = vpack.c.bf16 %v1690, %v1689
        %v1832 = vpack.c.bf16 %v1786, %v1785
        %v1833 = vpack.c.bf16 %v1282, %v1280
        %v1834 = vpack.c.bf16 %v1692, %v1691
        %v1835 = vpack.c.bf16 %v1788, %v1787
        %v1836 = vpack.c.bf16 %v974, %v974
        %v1837 = vld [vmem:[%s3] sm:$0xf]
        %v1838 = vld [vmem:[%s3 + $0x4] sm:$0xf]
        %v1839 = vld [vmem:[%s3 + $0x8] sm:$0xf]
        %v1840 = vld [vmem:[%s3 + $0xc] sm:$0xf]
        %v1841 = vld [vmem:[%s3 + $0x10] sm:$0xf]
        %v1842 = vld [vmem:[%s3 + $0x14] sm:$0xf]
        %v1843 = vld [vmem:[%s3 + $0x18] sm:$0xf]
        %v1844 = vld [vmem:[%s3 + $0x1c] sm:$0xf]
        %v1845 = vld [vmem:[%s3 + $0x20] sm:$0xf]
        %v1846 = vld [vmem:[%s3 + $0x24] sm:$0xf]
        %v1847 = vld [vmem:[%s3 + $0x28] sm:$0xf]
        %v1848 = vld [vmem:[%s3 + $0x2c] sm:$0xf]
        %v1849 = vld [vmem:[%s3 + $0x30] sm:$0xf]
        %v1850 = vld [vmem:[%s3 + $0x34] sm:$0xf]
        %v1851 = vld [vmem:[%s3 + $0x38] sm:$0xf]
        %v1852 = vld [vmem:[%s3 + $0x3c] sm:$0xf]
        %v1853 = vld [vmem:[%s3 + $0x40] sm:$0xf]
        %v1854 = vld [vmem:[%s3 + $0x44] sm:$0xf]
        %v1855 = vld [vmem:[%s3 + $0x48] sm:$0xf]
        %v1856 = vld [vmem:[%s3 + $0x4c] sm:$0xf]
        %v1857 = vld [vmem:[%s3 + $0x50] sm:$0xf]
        %v1858 = vld [vmem:[%s3 + $0x54] sm:$0xf]
        %v1859 = vld [vmem:[%s3 + $0x58] sm:$0xf]
        %v1860 = vld [vmem:[%s3 + $0x5c] sm:$0xf]
        %v1861 = vld [vmem:[%s3 + $0x60] sm:$0xf]
        %v1862 = vld [vmem:[%s3 + $0x64] sm:$0xf]
        %v1863 = vld [vmem:[%s3 + $0x68] sm:$0xf]
        %v1864 = vld [vmem:[%s3 + $0x6c] sm:$0xf]
        %v1865 = vld [vmem:[%s3 + $0x70] sm:$0xf]
        %v1866 = vld [vmem:[%s3 + $0x74] sm:$0xf]
        %v1867 = vld [vmem:[%s3 + $0x78] sm:$0xf]
        %v1868 = vld [vmem:[%s3 + $0x7c] sm:$0xf]
        %v1869 = vld [vmem:[%s3 + $0x80] sm:$0xf]
        %v1870 = vld [vmem:[%s3 + $0x84] sm:$0xf]
        %v1871 = vld [vmem:[%s3 + $0x88] sm:$0xf]
        %v1872 = vld [vmem:[%s3 + $0x8c] sm:$0xf]
        %v1873 = vld [vmem:[%s4] sm:$0x1]
        %v1875 = vlaneseq
        %v1876 = vshrl.u32 %v1875, 7
        %v1877 = vsub.s32 0, %v1876
        %v1878 = vrot.slane %v1873, %v1877
        %v1916 = vunpack.c.l.b16 %v1837
        %v1917 = vunpack.c.l.b16 %v1838
        %v1918 = vunpack.c.l.b16 %v1839
        %v1919 = vunpack.c.l.b16 %v1840
        %v1920 = vunpack.c.l.b16 %v1841
        %v1921 = vunpack.c.l.b16 %v1842
        %v1922 = vunpack.c.l.b16 %v1843
        %v1923 = vunpack.c.l.b16 %v1844
        %v1924 = vunpack.c.l.b16 %v1845
        %v1925 = vunpack.c.l.b16 %v1846
        %v1926 = vunpack.c.l.b16 %v1847
        %v1927 = vunpack.c.l.b16 %v1848
        %v1928 = vunpack.c.l.b16 %v1849
        %v1929 = vunpack.c.l.b16 %v1850
        %v1930 = vunpack.c.l.b16 %v1851
        %v1931 = vunpack.c.l.b16 %v1852
        %v1932 = vunpack.c.l.b16 %v1853
        %v1933 = vunpack.c.l.b16 %v1854
        %v1934 = vunpack.c.l.b16 %v1855
        %v1935 = vunpack.c.l.b16 %v1856
        %v1936 = vunpack.c.l.b16 %v1857
        %v1937 = vunpack.c.l.b16 %v1858
        %v1938 = vunpack.c.l.b16 %v1859
        %v1939 = vunpack.c.l.b16 %v1860
        %v1940 = vunpack.c.l.b16 %v1861
        %v1941 = vunpack.c.l.b16 %v1862
        %v1942 = vunpack.c.l.b16 %v1863
        %v1943 = vunpack.c.l.b16 %v1864
        %v1944 = vunpack.c.l.b16 %v1865
        %v1945 = vunpack.c.l.b16 %v1866
        %v1946 = vunpack.c.l.b16 %v1867
        %v1947 = vunpack.c.l.b16 %v1868
        %v1948 = vunpack.c.l.b16 %v1869
        %v1949 = vunpack.c.l.b16 %v1870
        %v1950 = vunpack.c.l.b16 %v1871
        %v1951 = vunpack.c.l.b16 %v1872
        %v1952 = vpack.c.b16 %v1917, %v1916
        %v1953 = vpack.c.b16 %v1919, %v1918
        %v1954 = vpack.c.b16 %v1921, %v1920
        %v1955 = vpack.c.b16 %v1923, %v1922
        %v1956 = vpack.c.b16 %v1925, %v1924
        %v1957 = vpack.c.b16 %v1927, %v1926
        %v1958 = vpack.c.b16 %v1929, %v1928
        %v1959 = vpack.c.b16 %v1931, %v1930
        %v1960 = vpack.c.b16 %v1933, %v1932
        %v1961 = vpack.c.b16 %v1935, %v1934
        %v1962 = vpack.c.b16 %v1937, %v1936
        %v1963 = vpack.c.b16 %v1939, %v1938
        %v1964 = vpack.c.b16 %v1941, %v1940
        %v1965 = vpack.c.b16 %v1943, %v1942
        %v1966 = vpack.c.b16 %v1945, %v1944
        %v1967 = vpack.c.b16 %v1947, %v1946
        %v1968 = vpack.c.b16 %v1949, %v1948
        %v1969 = vpack.c.b16 %v1951, %v1950
        %v1989 = vsel %vm1596, %v1791, 0
        %v1992 = vsel %vm1596, %v1794, 0
        %v1995 = vsel %vm1596, %v1797, 0
        %v1998 = vsel %vm1596, %v1800, 0
        %v2001 = vsel %vm1596, %v1803, 0
        %v2004 = vsel %vm1596, %v1806, 0
        %v2007 = vsel %vm1596, %v1809, 0
        %v2010 = vsel %vm1596, %v1812, 0
        %v2013 = vsel %vm1596, %v1815, 0
        %v2016 = vsel %vm1596, %v1818, 0
        %v2019 = vsel %vm1596, %v1821, 0
        %v2022 = vsel %vm1596, %v1824, 0
        %v2025 = vsel %vm1596, %v1827, 0
        %v2028 = vsel %vm1596, %v1830, 0
        %v2031 = vsel %vm1596, %v1833, 0
        %v2034 = vsel %vm1596, %v1836, 0
        %2036 = vmatprep.subr.bf16.mxu0 0
        %2037 = vmatpush1.bf16.msra.mxu0 %v1952
        %2038 = vmatprep.subr.bf16.mxu0 0
        %2039 = vmatpush1.bf16.msra.mxu0 %v1953
        %2040 = vmatprep.subr.bf16.mxu0 0
        %2041 = vmatpush1.bf16.msra.mxu0 %v1954
        %2042 = vmatprep.subr.bf16.mxu0 0
        %2043 = vmatpush1.bf16.msra.mxu0 %v1955
        %2044 = vmatprep.subr.bf16.mxu0 0
        %2045 = vmatpush1.bf16.msra.mxu0 %v1956
        %2046 = vmatprep.subr.bf16.mxu0 0
        %2047 = vmatpush1.bf16.msra.mxu0 %v1957
        %2048 = vmatprep.subr.bf16.mxu0 0
        %2049 = vmatpush1.bf16.msra.mxu0 %v1958
        %2050 = vmatprep.subr.bf16.mxu0 0
        %2051 = vmatpush1.bf16.msra.mxu0 %v1959
        %2052 = vmatprep.subr.bf16.mxu0 0
        %2053 = vmatpush1.bf16.msra.mxu0 %v1960
        %2054 = vmatprep.subr.bf16.mxu0 0
        %2055 = vmatpush1.bf16.msra.mxu0 %v1961
        %2056 = vmatprep.subr.bf16.mxu0 0
        %2057 = vmatpush1.bf16.msra.mxu0 %v1962
        %2058 = vmatprep.subr.bf16.mxu0 0
        %2059 = vmatpush1.bf16.msra.mxu0 %v1963
        %2060 = vmatprep.subr.bf16.mxu0 0
        %2061 = vmatpush1.bf16.msra.mxu0 %v1964
        %2062 = vmatprep.subr.bf16.mxu0 0
        %2063 = vmatpush1.bf16.msra.mxu0 %v1965
        %2064 = vmatprep.subr.bf16.mxu0 0
        %2065 = vmatpush1.bf16.msra.mxu0 %v1966
        %2066 = vmatprep.subr.bf16.mxu0 0
        %2067 = vmatpush1.bf16.msra.mxu0 %v1967
        %2068 = vmatprep.mubr.bf16.mxu0 %v1790
        %2069 = vmatmul.mubr.bf16.gmra.mrb[0].mxu0 %v1789
        %v2070 = vpop.f32.mrb[0].mxu0
        %v2071 = vadd.f32 %v1878, %v2070
        %v2072 = vpop.f32.mrb[0].mxu0
        %v2073 = vpop.f32.mrb[0].mxu0
        %v2074 = vadd.f32 %v1878, %v2073
        %v2075 = vpop.f32.mrb[0].mxu0
        %2076 = vmatprep.mubr.bf16.mxu0 %v1793
        %2077 = vmatmul.mubr.bf16.gmra.mrb[0].mxu0 %v1792
        %v2078 = vpop.f32.mrb[0].mxu0
        %v2079 = vadd.f32 %v1878, %v2078
        %v2080 = vpop.f32.mrb[0].mxu0
        %v2081 = vpop.f32.mrb[0].mxu0
        %v2082 = vadd.f32 %v1878, %v2081
        %v2083 = vpop.f32.mrb[0].mxu0
        %2084 = vmatprep.mubr.bf16.mxu0 %v1796
        %2085 = vmatmul.mubr.bf16.gmra.mrb[0].mxu0 %v1795
        %v2086 = vpop.f32.mrb[0].mxu0
        %v2087 = vadd.f32 %v1878, %v2086
        %v2088 = vpop.f32.mrb[0].mxu0
        %v2089 = vpop.f32.mrb[0].mxu0
        %v2090 = vadd.f32 %v1878, %v2089
        %v2091 = vpop.f32.mrb[0].mxu0
        %2092 = vmatprep.mubr.bf16.mxu0 %v1799
        %2093 = vmatmul.mubr.bf16.gmra.mrb[0].mxu0 %v1798
        %v2094 = vpop.f32.mrb[0].mxu0
        %v2095 = vadd.f32 %v1878, %v2094
        %v2096 = vpop.f32.mrb[0].mxu0
        %v2097 = vpop.f32.mrb[0].mxu0
        %v2098 = vadd.f32 %v1878, %v2097
        %v2099 = vpop.f32.mrb[0].mxu0
        %2100 = vmatprep.mubr.bf16.mxu0 %v1802
        %2101 = vmatmul.mubr.bf16.gmra.mrb[0].mxu0 %v1801
        %v2102 = vpop.f32.mrb[0].mxu0
        %v2103 = vadd.f32 %v1878, %v2102
        %v2104 = vpop.f32.mrb[0].mxu0
        %v2105 = vpop.f32.mrb[0].mxu0
        %v2106 = vadd.f32 %v1878, %v2105
        %v2107 = vpop.f32.mrb[0].mxu0
        %2108 = vmatprep.mubr.bf16.mxu0 %v1805
        %2109 = vmatmul.mubr.bf16.gmra.mrb[0].mxu0 %v1804
        %v2110 = vpop.f32.mrb[0].mxu0
        %v2111 = vadd.f32 %v1878, %v2110
        %v2112 = vpop.f32.mrb[0].mxu0
        %v2113 = vpop.f32.mrb[0].mxu0
        %v2114 = vadd.f32 %v1878, %v2113
        %v2115 = vpop.f32.mrb[0].mxu0
        %2116 = vmatprep.mubr.bf16.mxu0 %v1808
        %2117 = vmatmul.mubr.bf16.gmra.mrb[0].mxu0 %v1807
        %v2118 = vpop.f32.mrb[0].mxu0
        %v2119 = vadd.f32 %v1878, %v2118
        %v2120 = vpop.f32.mrb[0].mxu0
        %v2121 = vpop.f32.mrb[0].mxu0
        %v2122 = vadd.f32 %v1878, %v2121
        %v2123 = vpop.f32.mrb[0].mxu0
        %2124 = vmatprep.mubr.bf16.mxu0 %v1811
        %2125 = vmatmul.mubr.bf16.gmra.mrb[0].mxu0 %v1810
        %v2126 = vpop.f32.mrb[0].mxu0
        %v2127 = vadd.f32 %v1878, %v2126
        %v2128 = vpop.f32.mrb[0].mxu0
        %v2129 = vpop.f32.mrb[0].mxu0
        %v2130 = vadd.f32 %v1878, %v2129
        %v2131 = vpop.f32.mrb[0].mxu0
        %2132 = vmatprep.mubr.bf16.mxu0 %v1814
        %2133 = vmatmul.mubr.bf16.gmra.mrb[0].mxu0 %v1813
        %v2134 = vpop.f32.mrb[0].mxu0
        %v2135 = vadd.f32 %v1878, %v2134
        %v2136 = vpop.f32.mrb[0].mxu0
        %v2137 = vpop.f32.mrb[0].mxu0
        %v2138 = vadd.f32 %v1878, %v2137
        %v2139 = vpop.f32.mrb[0].mxu0
        %2140 = vmatprep.mubr.bf16.mxu0 %v1817
        %2141 = vmatmul.mubr.bf16.gmra.mrb[0].mxu0 %v1816
        %v2142 = vpop.f32.mrb[0].mxu0
        %v2143 = vadd.f32 %v1878, %v2142
        %v2144 = vpop.f32.mrb[0].mxu0
        %v2145 = vpop.f32.mrb[0].mxu0
        %v2146 = vadd.f32 %v1878, %v2145
        %v2147 = vpop.f32.mrb[0].mxu0
        %2148 = vmatprep.mubr.bf16.mxu0 %v1820
        %2149 = vmatmul.mubr.bf16.gmra.mrb[0].mxu0 %v1819
        %v2150 = vpop.f32.mrb[0].mxu0
        %v2151 = vadd.f32 %v1878, %v2150
        %v2152 = vpop.f32.mrb[0].mxu0
        %v2153 = vpop.f32.mrb[0].mxu0
        %v2154 = vadd.f32 %v1878, %v2153
        %v2155 = vpop.f32.mrb[0].mxu0
        %2156 = vmatprep.mubr.bf16.mxu0 %v1823
        %2157 = vmatmul.mubr.bf16.gmra.mrb[0].mxu0 %v1822
        %v2158 = vpop.f32.mrb[0].mxu0
        %v2159 = vadd.f32 %v1878, %v2158
        %v2160 = vpop.f32.mrb[0].mxu0
        %v2161 = vpop.f32.mrb[0].mxu0
        %v2162 = vadd.f32 %v1878, %v2161
        %v2163 = vpop.f32.mrb[0].mxu0
        %2164 = vmatprep.mubr.bf16.mxu0 %v1826
        %2165 = vmatmul.mubr.bf16.gmra.mrb[0].mxu0 %v1825
        %v2166 = vpop.f32.mrb[0].mxu0
        %v2167 = vadd.f32 %v1878, %v2166
        %v2168 = vpop.f32.mrb[0].mxu0
        %v2169 = vpop.f32.mrb[0].mxu0
        %v2170 = vadd.f32 %v1878, %v2169
        %v2171 = vpop.f32.mrb[0].mxu0
        %2172 = vmatprep.mubr.bf16.mxu0 %v1829
        %2173 = vmatmul.mubr.bf16.gmra.mrb[0].mxu0 %v1828
        %v2174 = vpop.f32.mrb[0].mxu0
        %v2175 = vadd.f32 %v1878, %v2174
        %v2176 = vpop.f32.mrb[0].mxu0
        %v2177 = vpop.f32.mrb[0].mxu0
        %v2178 = vadd.f32 %v1878, %v2177
        %v2179 = vpop.f32.mrb[0].mxu0
        %2180 = vmatprep.mubr.bf16.mxu0 %v1832
        %2181 = vmatmul.mubr.bf16.gmra.mrb[0].mxu0 %v1831
        %v2182 = vpop.f32.mrb[0].mxu0
        %v2183 = vadd.f32 %v1878, %v2182
        %v2184 = vpop.f32.mrb[0].mxu0
        %v2185 = vpop.f32.mrb[0].mxu0
        %v2186 = vadd.f32 %v1878, %v2185
        %v2187 = vpop.f32.mrb[0].mxu0
        %2188 = vmatprep.mubr.bf16.mxu0 %v1835
        %2189 = vmatmul.mubr.bf16.gmra.mrb[0].mxu0 %v1834
        %v2190 = vpop.f32.mrb[0].mxu0
        %v2191 = vadd.f32 %v1878, %v2190
        %v2192 = vpop.f32.mrb[0].mxu0
        %v2193 = vpop.f32.mrb[0].mxu0
        %v2194 = vadd.f32 %v1878, %v2193
        %v2195 = vpop.f32.mrb[0].mxu0
        %2196 = vdwg.mxu0
        %2197 = vmatprep.subr.bf16.mxu0 0
        %2198 = vmatpush1.bf16.msra.mxu0 %v1968
        %2199 = vmatprep.subr.bf16.mxu0 0
        %2200 = vmatpush1.bf16.msra.mxu0 %v1969
        %2201 = vmatprep.subr.bf16.mxu0 0
        %2202 = vmatpush1.bf16.msra.mxu0 0
        %2203 = vmatprep.subr.bf16.mxu0 0
        %2204 = vmatpush1.bf16.msra.mxu0 0
        %2205 = vmatprep.subr.bf16.mxu0 0
        %2206 = vmatpush1.bf16.msra.mxu0 0
        %2207 = vmatprep.subr.bf16.mxu0 0
        %2208 = vmatpush1.bf16.msra.mxu0 0
        %2209 = vmatprep.subr.bf16.mxu0 0
        %2210 = vmatpush1.bf16.msra.mxu0 0
        %2211 = vmatprep.subr.bf16.mxu0 0
        %2212 = vmatpush1.bf16.msra.mxu0 0
        %2213 = vmatprep.subr.bf16.mxu0 0
        %2214 = vmatpush1.bf16.msra.mxu0 0
        %2215 = vmatprep.subr.bf16.mxu0 0
        %2216 = vmatpush1.bf16.msra.mxu0 0
        %2217 = vmatprep.subr.bf16.mxu0 0
        %2218 = vmatpush1.bf16.msra.mxu0 0
        %2219 = vmatprep.subr.bf16.mxu0 0
        %2220 = vmatpush1.bf16.msra.mxu0 0
        %2221 = vmatprep.subr.bf16.mxu0 0
        %2222 = vmatpush1.bf16.msra.mxu0 0
        %2223 = vmatprep.subr.bf16.mxu0 0
        %2224 = vmatpush1.bf16.msra.mxu0 0
        %2225 = vmatprep.subr.bf16.mxu0 0
        %2226 = vmatpush1.bf16.msra.mxu0 0
        %2227 = vmatprep.subr.bf16.mxu0 0
        %2228 = vmatpush1.bf16.msra.mxu0 0
        %2229 = vmatprep.mubr.bf16.mxu0 0
        %2230 = vmatmul.mubr.bf16.gmra.mrb[0].mxu0 %v1989
        %v2231 = vpop.f32.mrb[0].mxu0
        %v2232 = vadd.f32 %v2071, %v2231
        %v2233 = vpop.f32.mrb[0].mxu0
        %v2234 = vpop.f32.mrb[0].mxu0
        %v2235 = vadd.f32 %v2074, %v2234
        %v2236 = vpop.f32.mrb[0].mxu0
        %2237 = vmatprep.mubr.bf16.mxu0 0
        %2238 = vmatmul.mubr.bf16.gmra.mrb[0].mxu0 %v1992
        %v2239 = vpop.f32.mrb[0].mxu0
        %v2240 = vadd.f32 %v2079, %v2239
        %v2241 = vpop.f32.mrb[0].mxu0
        %v2242 = vpop.f32.mrb[0].mxu0
        %v2243 = vadd.f32 %v2082, %v2242
        %v2244 = vpop.f32.mrb[0].mxu0
        %2245 = vmatprep.mubr.bf16.mxu0 0
        %2246 = vmatmul.mubr.bf16.gmra.mrb[0].mxu0 %v1995
        %v2247 = vpop.f32.mrb[0].mxu0
        %v2248 = vadd.f32 %v2087, %v2247
        %v2249 = vpop.f32.mrb[0].mxu0
        %v2250 = vpop.f32.mrb[0].mxu0
        %v2251 = vadd.f32 %v2090, %v2250
        %v2252 = vpop.f32.mrb[0].mxu0
        %2253 = vmatprep.mubr.bf16.mxu0 0
        %2254 = vmatmul.mubr.bf16.gmra.mrb[0].mxu0 %v1998
        %v2255 = vpop.f32.mrb[0].mxu0
        %v2256 = vadd.f32 %v2095, %v2255
        %v2257 = vpop.f32.mrb[0].mxu0
        %v2258 = vpop.f32.mrb[0].mxu0
        %v2259 = vadd.f32 %v2098, %v2258
        %v2260 = vpop.f32.mrb[0].mxu0
        %2261 = vmatprep.mubr.bf16.mxu0 0
        %2262 = vmatmul.mubr.bf16.gmra.mrb[0].mxu0 %v2001
        %v2263 = vpop.f32.mrb[0].mxu0
        %v2264 = vadd.f32 %v2103, %v2263
        %v2265 = vpop.f32.mrb[0].mxu0
        %v2266 = vpop.f32.mrb[0].mxu0
        %v2267 = vadd.f32 %v2106, %v2266
        %v2268 = vpop.f32.mrb[0].mxu0
        %2269 = vmatprep.mubr.bf16.mxu0 0
        %2270 = vmatmul.mubr.bf16.gmra.mrb[0].mxu0 %v2004
        %v2271 = vpop.f32.mrb[0].mxu0
        %v2272 = vadd.f32 %v2111, %v2271
        %v2273 = vpop.f32.mrb[0].mxu0
        %v2274 = vpop.f32.mrb[0].mxu0
        %v2275 = vadd.f32 %v2114, %v2274
        %v2276 = vpop.f32.mrb[0].mxu0
        %2277 = vmatprep.mubr.bf16.mxu0 0
        %2278 = vmatmul.mubr.bf16.gmra.mrb[0].mxu0 %v2007
        %v2279 = vpop.f32.mrb[0].mxu0
        %v2280 = vadd.f32 %v2119, %v2279
        %v2281 = vpop.f32.mrb[0].mxu0
        %v2282 = vpop.f32.mrb[0].mxu0
        %v2283 = vadd.f32 %v2122, %v2282
        %v2284 = vpop.f32.mrb[0].mxu0
        %2285 = vmatprep.mubr.bf16.mxu0 0
        %2286 = vmatmul.mubr.bf16.gmra.mrb[0].mxu0 %v2010
        %v2287 = vpop.f32.mrb[0].mxu0
        %v2288 = vadd.f32 %v2127, %v2287
        %v2289 = vpop.f32.mrb[0].mxu0
        %v2290 = vpop.f32.mrb[0].mxu0
        %v2291 = vadd.f32 %v2130, %v2290
        %v2292 = vpop.f32.mrb[0].mxu0
        %2293 = vmatprep.mubr.bf16.mxu0 0
        %2294 = vmatmul.mubr.bf16.gmra.mrb[0].mxu0 %v2013
        %v2295 = vpop.f32.mrb[0].mxu0
        %v2296 = vadd.f32 %v2135, %v2295
        %v2297 = vpop.f32.mrb[0].mxu0
        %v2298 = vpop.f32.mrb[0].mxu0
        %v2299 = vadd.f32 %v2138, %v2298
        %v2300 = vpop.f32.mrb[0].mxu0
        %2301 = vmatprep.mubr.bf16.mxu0 0
        %2302 = vmatmul.mubr.bf16.gmra.mrb[0].mxu0 %v2016
        %v2303 = vpop.f32.mrb[0].mxu0
        %v2304 = vadd.f32 %v2143, %v2303
        %v2305 = vpop.f32.mrb[0].mxu0
        %v2306 = vpop.f32.mrb[0].mxu0
        %v2307 = vadd.f32 %v2146, %v2306
        %v2308 = vpop.f32.mrb[0].mxu0
        %2309 = vmatprep.mubr.bf16.mxu0 0
        %2310 = vmatmul.mubr.bf16.gmra.mrb[0].mxu0 %v2019
        %v2311 = vpop.f32.mrb[0].mxu0
        %v2312 = vadd.f32 %v2151, %v2311
        %v2313 = vpop.f32.mrb[0].mxu0
        %v2314 = vpop.f32.mrb[0].mxu0
        %v2315 = vadd.f32 %v2154, %v2314
        %v2316 = vpop.f32.mrb[0].mxu0
        %2317 = vmatprep.mubr.bf16.mxu0 0
        %2318 = vmatmul.mubr.bf16.gmra.mrb[0].mxu0 %v2022
        %v2319 = vpop.f32.mrb[0].mxu0
        %v2320 = vadd.f32 %v2159, %v2319
        %v2321 = vpop.f32.mrb[0].mxu0
        %v2322 = vpop.f32.mrb[0].mxu0
        %v2323 = vadd.f32 %v2162, %v2322
        %v2324 = vpop.f32.mrb[0].mxu0
        %2325 = vmatprep.mubr.bf16.mxu0 0
        %2326 = vmatmul.mubr.bf16.gmra.mrb[0].mxu0 %v2025
        %v2327 = vpop.f32.mrb[0].mxu0
        %v2328 = vadd.f32 %v2167, %v2327
        %v2329 = vpop.f32.mrb[0].mxu0
        %v2330 = vpop.f32.mrb[0].mxu0
        %v2331 = vadd.f32 %v2170, %v2330
        %v2332 = vpop.f32.mrb[0].mxu0
        %2333 = vmatprep.mubr.bf16.mxu0 0
        %2334 = vmatmul.mubr.bf16.gmra.mrb[0].mxu0 %v2028
        %v2335 = vpop.f32.mrb[0].mxu0
        %v2336 = vadd.f32 %v2175, %v2335
        %v2337 = vpop.f32.mrb[0].mxu0
        %v2338 = vpop.f32.mrb[0].mxu0
        %v2339 = vadd.f32 %v2178, %v2338
        %v2340 = vpop.f32.mrb[0].mxu0
        %2341 = vmatprep.mubr.bf16.mxu0 0
        %2342 = vmatmul.mubr.bf16.gmra.mrb[0].mxu0 %v2031
        %v2343 = vpop.f32.mrb[0].mxu0
        %v2344 = vadd.f32 %v2183, %v2343
        %v2345 = vpop.f32.mrb[0].mxu0
        %v2346 = vpop.f32.mrb[0].mxu0
        %v2347 = vadd.f32 %v2186, %v2346
        %v2348 = vpop.f32.mrb[0].mxu0
        %2349 = vmatprep.mubr.bf16.mxu0 0
        %2350 = vmatmul.mubr.bf16.gmra.mrb[0].mxu0 %v2034
        %v2351 = vpop.f32.mrb[0].mxu0
        %v2352 = vadd.f32 %v2191, %v2351
        %v2353 = vpop.f32.mrb[0].mxu0
        %v2354 = vpop.f32.mrb[0].mxu0
        %v2355 = vadd.f32 %v2194, %v2354
        %v2356 = vpop.f32.mrb[0].mxu0
        %2357 = vdwg.mxu0
        %v2358 = vmax.f32 %v2232, 0.0
        %v2359 = vmax.f32 %v2235, 0.0
        %v2360 = vmax.f32 %v2240, 0.0
        %v2361 = vmax.f32 %v2243, 0.0
        %v2362 = vmax.f32 %v2248, 0.0
        %v2363 = vmax.f32 %v2251, 0.0
        %v2364 = vmax.f32 %v2256, 0.0
        %v2365 = vmax.f32 %v2259, 0.0
        %v2366 = vmax.f32 %v2264, 0.0
        %v2367 = vmax.f32 %v2267, 0.0
        %v2368 = vmax.f32 %v2272, 0.0
        %v2369 = vmax.f32 %v2275, 0.0
        %v2370 = vmax.f32 %v2280, 0.0
        %v2371 = vmax.f32 %v2283, 0.0
        %v2372 = vmax.f32 %v2288, 0.0
        %v2373 = vmax.f32 %v2291, 0.0
        %v2374 = vmax.f32 %v2296, 0.0
        %v2375 = vmax.f32 %v2299, 0.0
        %v2376 = vmax.f32 %v2304, 0.0
        %v2377 = vmax.f32 %v2307, 0.0
        %v2378 = vmax.f32 %v2312, 0.0
        %v2379 = vmax.f32 %v2315, 0.0
        %v2380 = vmax.f32 %v2320, 0.0
        %v2381 = vmax.f32 %v2323, 0.0
        %v2382 = vmax.f32 %v2328, 0.0
        %v2383 = vmax.f32 %v2331, 0.0
        %v2384 = vmax.f32 %v2336, 0.0
        %v2385 = vmax.f32 %v2339, 0.0
        %v2386 = vmax.f32 %v2344, 0.0
        %v2387 = vmax.f32 %v2347, 0.0
        %v2388 = vmax.f32 %v2352, 0.0
        %v2389 = vmax.f32 %v2355, 0.0
        %v2390 = vpack.c.bf16 %v2359, %v2358
        %v2391 = vpack.c.bf16 %v2361, %v2360
        %v2392 = vpack.c.bf16 %v2363, %v2362
        %v2393 = vpack.c.bf16 %v2365, %v2364
        %v2394 = vpack.c.bf16 %v2367, %v2366
        %v2395 = vpack.c.bf16 %v2369, %v2368
        %v2396 = vpack.c.bf16 %v2371, %v2370
        %v2397 = vpack.c.bf16 %v2373, %v2372
        %v2398 = vpack.c.bf16 %v2375, %v2374
        %v2399 = vpack.c.bf16 %v2377, %v2376
        %v2400 = vpack.c.bf16 %v2379, %v2378
        %v2401 = vpack.c.bf16 %v2381, %v2380
        %v2402 = vpack.c.bf16 %v2383, %v2382
        %v2403 = vpack.c.bf16 %v2385, %v2384
        %v2404 = vpack.c.bf16 %v2387, %v2386
        %v2405 = vpack.c.bf16 %v2389, %v2388
        %v2406 = vld [vmem:[%s5] sm:$0xf]
        %v2407 = vld [vmem:[%s5 + $0x4] sm:$0xf]
        %v2408 = vld [vmem:[%s5 + $0x8] sm:$0xf]
        %v2409 = vld [vmem:[%s5 + $0xc] sm:$0xf]
        %v2410 = vld [vmem:[%s6] sm:$0x1]
        %v2412 = vlaneseq
        %v2413 = vshrl.u32 %v2412, 7
        %v2414 = vsub.s32 0, %v2413
        %v2415 = vrot.slane %v2410, %v2414
        %v2421 = vunpack.c.l.b16 %v2406
        %v2422 = vunpack.c.l.b16 %v2407
        %v2423 = vunpack.c.l.b16 %v2408
        %v2424 = vunpack.c.l.b16 %v2409
        %v2425 = vpack.c.b16 %v2422, %v2421
        %v2426 = vpack.c.b16 %v2424, %v2423
        %v2430 = vsel %vm1596, %v2390, 0
        %v2433 = vsel %vm1596, %v2391, 0
        %v2436 = vsel %vm1596, %v2392, 0
        %v2439 = vsel %vm1596, %v2393, 0
        %v2442 = vsel %vm1596, %v2394, 0
        %v2445 = vsel %vm1596, %v2395, 0
        %v2448 = vsel %vm1596, %v2396, 0
        %v2451 = vsel %vm1596, %v2397, 0
        %v2454 = vsel %vm1596, %v2398, 0
        %v2457 = vsel %vm1596, %v2399, 0
        %v2460 = vsel %vm1596, %v2400, 0
        %v2463 = vsel %vm1596, %v2401, 0
        %v2466 = vsel %vm1596, %v2402, 0
        %v2469 = vsel %vm1596, %v2403, 0
        %v2472 = vsel %vm1596, %v2404, 0
        %v2475 = vsel %vm1596, %v2405, 0
        %2477 = vmatprep.subr.bf16.mxu0 0
        %2478 = vmatpush1.bf16.msra.mxu0 %v2425
        %2479 = vmatprep.subr.bf16.mxu0 0
        %2480 = vmatpush1.bf16.msra.mxu0 %v2426
        %2481 = vmatprep.subr.bf16.mxu0 0
        %2482 = vmatpush1.bf16.msra.mxu0 0
        %2483 = vmatprep.subr.bf16.mxu0 0
        %2484 = vmatpush1.bf16.msra.mxu0 0
        %2485 = vmatprep.subr.bf16.mxu0 0
        %2486 = vmatpush1.bf16.msra.mxu0 0
        %2487 = vmatprep.subr.bf16.mxu0 0
        %2488 = vmatpush1.bf16.msra.mxu0 0
        %2489 = vmatprep.subr.bf16.mxu0 0
        %2490 = vmatpush1.bf16.msra.mxu0 0
        %2491 = vmatprep.subr.bf16.mxu0 0
        %2492 = vmatpush1.bf16.msra.mxu0 0
        %2493 = vmatprep.subr.bf16.mxu0 0
        %2494 = vmatpush1.bf16.msra.mxu0 0
        %2495 = vmatprep.subr.bf16.mxu0 0
        %2496 = vmatpush1.bf16.msra.mxu0 0
        %2497 = vmatprep.subr.bf16.mxu0 0
        %2498 = vmatpush1.bf16.msra.mxu0 0
        %2499 = vmatprep.subr.bf16.mxu0 0
        %2500 = vmatpush1.bf16.msra.mxu0 0
        %2501 = vmatprep.subr.bf16.mxu0 0
        %2502 = vmatpush1.bf16.msra.mxu0 0
        %2503 = vmatprep.subr.bf16.mxu0 0
        %2504 = vmatpush1.bf16.msra.mxu0 0
        %2505 = vmatprep.subr.bf16.mxu0 0
        %2506 = vmatpush1.bf16.msra.mxu0 0
        %2507 = vmatprep.subr.bf16.mxu0 0
        %2508 = vmatpush1.bf16.msra.mxu0 0
        %2509 = vmatprep.mubr.bf16.mxu0 0
        %2510 = vmatmul.mubr.bf16.gmra.mrb[0].mxu0 %v2430
        %v2511 = vpop.f32.mrb[0].mxu0
        %v2512 = vadd.f32 %v2415, %v2511
        %v2513 = vpop.f32.mrb[0].mxu0
        %v2514 = vpop.f32.mrb[0].mxu0
        %v2515 = vadd.f32 %v2415, %v2514
        %v2516 = vpop.f32.mrb[0].mxu0
        %2517 = vmatprep.mubr.bf16.mxu0 0
        %2518 = vmatmul.mubr.bf16.gmra.mrb[0].mxu0 %v2433
        %v2519 = vpop.f32.mrb[0].mxu0
        %v2520 = vadd.f32 %v2415, %v2519
        %v2521 = vpop.f32.mrb[0].mxu0
        %v2522 = vpop.f32.mrb[0].mxu0
        %v2523 = vadd.f32 %v2415, %v2522
        %v2524 = vpop.f32.mrb[0].mxu0
        %2525 = vmatprep.mubr.bf16.mxu0 0
        %2526 = vmatmul.mubr.bf16.gmra.mrb[0].mxu0 %v2436
        %v2527 = vpop.f32.mrb[0].mxu0
        %v2528 = vadd.f32 %v2415, %v2527
        %v2529 = vpop.f32.mrb[0].mxu0
        %v2530 = vpop.f32.mrb[0].mxu0
        %v2531 = vadd.f32 %v2415, %v2530
        %v2532 = vpop.f32.mrb[0].mxu0
        %2533 = vmatprep.mubr.bf16.mxu0 0
        %2534 = vmatmul.mubr.bf16.gmra.mrb[0].mxu0 %v2439
        %v2535 = vpop.f32.mrb[0].mxu0
        %v2536 = vadd.f32 %v2415, %v2535
        %v2537 = vpop.f32.mrb[0].mxu0
        %v2538 = vpop.f32.mrb[0].mxu0
        %v2539 = vadd.f32 %v2415, %v2538
        %v2540 = vpop.f32.mrb[0].mxu0
        %2541 = vmatprep.mubr.bf16.mxu0 0
        %2542 = vmatmul.mubr.bf16.gmra.mrb[0].mxu0 %v2442
        %v2543 = vpop.f32.mrb[0].mxu0
        %v2544 = vadd.f32 %v2415, %v2543
        %v2545 = vpop.f32.mrb[0].mxu0
        %v2546 = vpop.f32.mrb[0].mxu0
        %v2547 = vadd.f32 %v2415, %v2546
        %v2548 = vpop.f32.mrb[0].mxu0
        %2549 = vmatprep.mubr.bf16.mxu0 0
        %2550 = vmatmul.mubr.bf16.gmra.mrb[0].mxu0 %v2445
        %v2551 = vpop.f32.mrb[0].mxu0
        %v2552 = vadd.f32 %v2415, %v2551
        %v2553 = vpop.f32.mrb[0].mxu0
        %v2554 = vpop.f32.mrb[0].mxu0
        %v2555 = vadd.f32 %v2415, %v2554
        %v2556 = vpop.f32.mrb[0].mxu0
        %2557 = vmatprep.mubr.bf16.mxu0 0
        %2558 = vmatmul.mubr.bf16.gmra.mrb[0].mxu0 %v2448
        %v2559 = vpop.f32.mrb[0].mxu0
        %v2560 = vadd.f32 %v2415, %v2559
        %v2561 = vpop.f32.mrb[0].mxu0
        %v2562 = vpop.f32.mrb[0].mxu0
        %v2563 = vadd.f32 %v2415, %v2562
        %v2564 = vpop.f32.mrb[0].mxu0
        %2565 = vmatprep.mubr.bf16.mxu0 0
        %2566 = vmatmul.mubr.bf16.gmra.mrb[0].mxu0 %v2451
        %v2567 = vpop.f32.mrb[0].mxu0
        %v2568 = vadd.f32 %v2415, %v2567
        %v2569 = vpop.f32.mrb[0].mxu0
        %v2570 = vpop.f32.mrb[0].mxu0
        %v2571 = vadd.f32 %v2415, %v2570
        %v2572 = vpop.f32.mrb[0].mxu0
        %2573 = vmatprep.mubr.bf16.mxu0 0
        %2574 = vmatmul.mubr.bf16.gmra.mrb[0].mxu0 %v2454
        %v2575 = vpop.f32.mrb[0].mxu0
        %v2576 = vadd.f32 %v2415, %v2575
        %v2577 = vpop.f32.mrb[0].mxu0
        %v2578 = vpop.f32.mrb[0].mxu0
        %v2579 = vadd.f32 %v2415, %v2578
        %v2580 = vpop.f32.mrb[0].mxu0
        %2581 = vmatprep.mubr.bf16.mxu0 0
        %2582 = vmatmul.mubr.bf16.gmra.mrb[0].mxu0 %v2457
        %v2583 = vpop.f32.mrb[0].mxu0
        %v2584 = vadd.f32 %v2415, %v2583
        %v2585 = vpop.f32.mrb[0].mxu0
        %v2586 = vpop.f32.mrb[0].mxu0
        %v2587 = vadd.f32 %v2415, %v2586
        %v2588 = vpop.f32.mrb[0].mxu0
        %2589 = vmatprep.mubr.bf16.mxu0 0
        %2590 = vmatmul.mubr.bf16.gmra.mrb[0].mxu0 %v2460
        %v2591 = vpop.f32.mrb[0].mxu0
        %v2592 = vadd.f32 %v2415, %v2591
        %v2593 = vpop.f32.mrb[0].mxu0
        %v2594 = vpop.f32.mrb[0].mxu0
        %v2595 = vadd.f32 %v2415, %v2594
        %v2596 = vpop.f32.mrb[0].mxu0
        %2597 = vmatprep.mubr.bf16.mxu0 0
        %2598 = vmatmul.mubr.bf16.gmra.mrb[0].mxu0 %v2463
        %v2599 = vpop.f32.mrb[0].mxu0
        %v2600 = vadd.f32 %v2415, %v2599
        %v2601 = vpop.f32.mrb[0].mxu0
        %v2602 = vpop.f32.mrb[0].mxu0
        %v2603 = vadd.f32 %v2415, %v2602
        %v2604 = vpop.f32.mrb[0].mxu0
        %2605 = vmatprep.mubr.bf16.mxu0 0
        %2606 = vmatmul.mubr.bf16.gmra.mrb[0].mxu0 %v2466
        %v2607 = vpop.f32.mrb[0].mxu0
        %v2608 = vadd.f32 %v2415, %v2607
        %v2609 = vpop.f32.mrb[0].mxu0
        %v2610 = vpop.f32.mrb[0].mxu0
        %v2611 = vadd.f32 %v2415, %v2610
        %v2612 = vpop.f32.mrb[0].mxu0
        %2613 = vmatprep.mubr.bf16.mxu0 0
        %2614 = vmatmul.mubr.bf16.gmra.mrb[0].mxu0 %v2469
        %v2615 = vpop.f32.mrb[0].mxu0
        %v2616 = vadd.f32 %v2415, %v2615
        %v2617 = vpop.f32.mrb[0].mxu0
        %v2618 = vpop.f32.mrb[0].mxu0
        %v2619 = vadd.f32 %v2415, %v2618
        %v2620 = vpop.f32.mrb[0].mxu0
        %2621 = vmatprep.mubr.bf16.mxu0 0
        %2622 = vmatmul.mubr.bf16.gmra.mrb[0].mxu0 %v2472
        %v2623 = vpop.f32.mrb[0].mxu0
        %v2624 = vadd.f32 %v2415, %v2623
        %v2625 = vpop.f32.mrb[0].mxu0
        %v2626 = vpop.f32.mrb[0].mxu0
        %v2627 = vadd.f32 %v2415, %v2626
        %v2628 = vpop.f32.mrb[0].mxu0
        %2629 = vmatprep.mubr.bf16.mxu0 0
        %2630 = vmatmul.mubr.bf16.gmra.mrb[0].mxu0 %v2475
        %v2631 = vpop.f32.mrb[0].mxu0
        %v2632 = vadd.f32 %v2415, %v2631
        %v2633 = vpop.f32.mrb[0].mxu0
        %v2634 = vpop.f32.mrb[0].mxu0
        %v2635 = vadd.f32 %v2415, %v2634
        %v2636 = vpop.f32.mrb[0].mxu0
        %2637 = vdwg.mxu0
        %v2638 = vadd.f32 %v2512, %v298
        %v2639 = vadd.f32 %v2515, %v299
        %v2640 = vadd.f32 %v2520, %v300
        %v2641 = vadd.f32 %v2523, %v301
        %v2642 = vadd.f32 %v2528, %v302
        %v2643 = vadd.f32 %v2531, %v303
        %v2644 = vadd.f32 %v2536, %v304
        %v2645 = vadd.f32 %v2539, %v305
        %v2646 = vadd.f32 %v2544, %v306
        %v2647 = vadd.f32 %v2547, %v307
        %v2648 = vadd.f32 %v2552, %v308
        %v2649 = vadd.f32 %v2555, %v309
        %v2650 = vadd.f32 %v2560, %v310
        %v2651 = vadd.f32 %v2563, %v311
        %v2652 = vadd.f32 %v2568, %v312
        %v2653 = vadd.f32 %v2571, %v313
        %v2654 = vadd.f32 %v2576, %v314
        %v2655 = vadd.f32 %v2579, %v315
        %v2656 = vadd.f32 %v2584, %v316
        %v2657 = vadd.f32 %v2587, %v317
        %v2658 = vadd.f32 %v2592, %v318
        %v2659 = vadd.f32 %v2595, %v319
        %v2660 = vadd.f32 %v2600, %v320
        %v2661 = vadd.f32 %v2603, %v321
        %v2662 = vadd.f32 %v2608, %v322
        %v2663 = vadd.f32 %v2611, %v323
        %v2664 = vadd.f32 %v2616, %v324
        %v2665 = vadd.f32 %v2619, %v325
        %v2666 = vadd.f32 %v2624, %v326
        %v2667 = vadd.f32 %v2627, %v327
        %v2668 = vadd.f32 %v2632, %v328
        %v2669 = vadd.f32 %v2635, %v329
        %v2670 = vmax.f32 %v2638, 0.0
        %v2671 = vmax.f32 %v2639, 0.0
        %v2672 = vmax.f32 %v2640, 0.0
        %v2673 = vmax.f32 %v2641, 0.0
        %v2674 = vmax.f32 %v2642, 0.0
        %v2675 = vmax.f32 %v2643, 0.0
        %v2676 = vmax.f32 %v2644, 0.0
        %v2677 = vmax.f32 %v2645, 0.0
        %v2678 = vmax.f32 %v2646, 0.0
        %v2679 = vmax.f32 %v2647, 0.0
        %v2680 = vmax.f32 %v2648, 0.0
        %v2681 = vmax.f32 %v2649, 0.0
        %v2682 = vmax.f32 %v2650, 0.0
        %v2683 = vmax.f32 %v2651, 0.0
        %v2684 = vmax.f32 %v2652, 0.0
        %v2685 = vmax.f32 %v2653, 0.0
        %v2686 = vmax.f32 %v2654, 0.0
        %v2687 = vmax.f32 %v2655, 0.0
        %v2688 = vmax.f32 %v2656, 0.0
        %v2689 = vmax.f32 %v2657, 0.0
        %v2690 = vmax.f32 %v2658, 0.0
        %v2691 = vmax.f32 %v2659, 0.0
        %v2692 = vmax.f32 %v2660, 0.0
        %v2693 = vmax.f32 %v2661, 0.0
        %v2694 = vmax.f32 %v2662, 0.0
        %v2695 = vmax.f32 %v2663, 0.0
        %v2696 = vmax.f32 %v2664, 0.0
        %v2697 = vmax.f32 %v2665, 0.0
        %v2698 = vmax.f32 %v2666, 0.0
        %v2699 = vmax.f32 %v2667, 0.0
        %v2700 = vmax.f32 %v2668, 0.0
        %v2701 = vmax.f32 %v2669, 0.0
        %2702 = vst [vmem:[%s296] sm:$0xff] %v2670
        %2703 = vst [vmem:[%s296 + $0x8] sm:$0xff] %v2671
        %2704 = vst [vmem:[%s296 + $0x10] sm:$0xff] %v2672
        %2705 = vst [vmem:[%s296 + $0x18] sm:$0xff] %v2673
        %2706 = vst [vmem:[%s296 + $0x20] sm:$0xff] %v2674
        %2707 = vst [vmem:[%s296 + $0x28] sm:$0xff] %v2675
        %2708 = vst [vmem:[%s296 + $0x30] sm:$0xff] %v2676
        %2709 = vst [vmem:[%s296 + $0x38] sm:$0xff] %v2677
        %2710 = vst [vmem:[%s296 + $0x40] sm:$0xff] %v2678
        %2711 = vst [vmem:[%s296 + $0x48] sm:$0xff] %v2679
        %2712 = vst [vmem:[%s296 + $0x50] sm:$0xff] %v2680
        %2713 = vst [vmem:[%s296 + $0x58] sm:$0xff] %v2681
        %2714 = vst [vmem:[%s296 + $0x60] sm:$0xff] %v2682
        %2715 = vst [vmem:[%s296 + $0x68] sm:$0xff] %v2683
        %2716 = vst [vmem:[%s296 + $0x70] sm:$0xff] %v2684
        %2717 = vst [vmem:[%s296 + $0x78] sm:$0xff] %v2685
        %2718 = vst [vmem:[%s296 + $0x80] sm:$0xff] %v2686
        %2719 = vst [vmem:[%s296 + $0x88] sm:$0xff] %v2687
        %2720 = vst [vmem:[%s296 + $0x90] sm:$0xff] %v2688
        %2721 = vst [vmem:[%s296 + $0x98] sm:$0xff] %v2689
        %2722 = vst [vmem:[%s296 + $0xa0] sm:$0xff] %v2690
        %2723 = vst [vmem:[%s296 + $0xa8] sm:$0xff] %v2691
        %2724 = vst [vmem:[%s296 + $0xb0] sm:$0xff] %v2692
        %2725 = vst [vmem:[%s296 + $0xb8] sm:$0xff] %v2693
        %2726 = vst [vmem:[%s296 + $0xc0] sm:$0xff] %v2694
        %2727 = vst [vmem:[%s296 + $0xc8] sm:$0xff] %v2695
        %2728 = vst [vmem:[%s296 + $0xd0] sm:$0xff] %v2696
        %2729 = vst [vmem:[%s296 + $0xd8] sm:$0xff] %v2697
        %2730 = vst [vmem:[%s296 + $0xe0] sm:$0xff] %v2698
        %2731 = vst [vmem:[%s296 + $0xe8] sm:$0xff] %v2699
        %2732 = vst [vmem:[%s296 + $0xf0] sm:$0xff] %v2700
        %2733 = vst [vmem:[%s296 + $0xf8] sm:$0xff] %v2701
        %s2734 = sand.u32 %s184, 1
        %s2735 = scalar_lea.sflag [#allocation4], %s2734
        %s2736 = sand.u32 %s184, 1
        %s2737 = smul.addr %s2736, 256
        %s2738 = scalar_lea.vmem [#allocation5], %s2737
        // Predicated region
        $region53: #{tpu_custom_call.1} parent=47 // pred_check
          %p2739 = pneg %p194
        $region54: #{tpu_custom_call.1} parent=47 // pred_check_branch
          %2741 = sbr.rel (%p2739) target = $region56
        $region55: #{tpu_custom_call.1} parent=47 // pred_region
          %s2743 = ssub.s32 4096, 4096
          %2744 = vsyncadd %s2735, %s2743
          %s2745 = smul.addr %s24, 32
          %s2746 = smul.addr %s2745, 128
          %s2747 = scalar_lea.hbm %s7, %s2746
          %s2748 = sshll.u32 %s2738, 4
          %s2749 = int_to_ptr.vmem [resolvable:$true] %s2748
          %2754 = dma.vmem_to_hbm [thread:$0]  %s2749, 4096, %s2747, %s2735, 128, 128, 8
        $region56: #{tpu_custom_call.1} parent=47 // pred_fallthru
          _
      $region48: #{tpu_custom_call.1} parent=5 // pred_fallthru
        _
      %p2755 = scmp.le.s32.totalorder 2, %s19
      // Predicated region
      $region57: #{tpu_custom_call.1} parent=5 // pred_check
        %p2756 = pneg %p2755
      $region58: #{tpu_custom_call.1} parent=5 // pred_check_branch
        %2758 = sbr.rel (%p2756) target = $region60
      $region59: #{tpu_custom_call.1} parent=5 // pred_region
        %s2759 = ssub.s32 %s19, 2
        // Predicated region
        $region61: #{tpu_custom_call.1} parent=59 // pred_check
          %p2760 = pneg %p200
        $region62: #{tpu_custom_call.1} parent=59 // pred_check_branch
          %2762 = sbr.rel (%p2760) target = $region64
        $region63: #{tpu_custom_call.1} parent=59 // pred_region
          %s2763 = sand.u32 %s185, 1
          %s2764 = scalar_lea.sflag [#allocation4], %s2763
          %s2765 = sand.u32 %s185, 1
          %s2766 = smul.addr %s2765, 256
          %s2767 = scalar_lea.vmem [#allocation5], %s2766
          %2768 = dma.done %s2764, 4096
        $region64: #{tpu_custom_call.1} parent=59 // pred_fallthru
          _
      $region60: #{tpu_custom_call.1} parent=5 // pred_fallthru
        _
    $region6: #{tpu_custom_call.1} parent=1 // loop_footer
      %s23 = sadd.s32 1, %s19
    $region7: #{tpu_custom_call.1} parent=1 // loop_footer_branch
      %18 = sbr.rel target = $region3
    $region8: #{tpu_custom_call.1} parent=1 // loop_exit
      _
    %2769 = vsyncpa [#allocation3], 1
    %s2770 = scalar_lea.sflag [#allocation3], 1
    %2771 = vsyncpa %s2770, 1
    %2772 = vsyncpa [#allocation4], 1
    %s2773 = scalar_lea.sflag [#allocation4], 1
    %2774 = vsyncpa %s2773, 1

</llo_original>
